<compile_context>
chip_gen: v6e
topology: v6e:2x2x1
jax: 0.10.0
libtpu: 0.0.40
codegen_flags: <defaults>
</compile_context>

<pallas_src>
import functools
import math

import numpy as np
import jax
import jax.numpy as jnp
from jax import lax
from jax.experimental import pallas as pl
from jax.experimental.pallas import tpu as pltpu

# ------------------------- module hyper-parameters --------------------------
MAX_RADIUS = 3.0
NUM_BASIS = 10
HIDDEN_DIM = 32
C_IN = 16                      # irreps_input = "16x0e"
MUL_0E = 32                    # "32x0e" block of the potential (only first 3 reach the curl)
MUL_1O = 16                    # "16x1o" block (provably dead for the output)
WEIGHT_NUMEL = C_IN * MUL_0E + C_IN * MUL_1O   # FullyConnectedTensorProduct.weight_numel = 768
EMB_CONST = 1.14136 * math.exp(2.0)            # e3nn 'smooth_finite' basis constant


def _silu_second_moment_const() -> float:
    # e3nn's normalize2mom(silu): constant c so that E[(c*silu(z))^2] = 1, z~N(0,1).
    z = np.linspace(-12.0, 12.0, 200001)
    pdf = np.exp(-0.5 * z * z) / np.sqrt(2.0 * np.pi)
    silu = z / (1.0 + np.exp(-z))
    f = (silu ** 2) * pdf
    m2 = float(np.sum(0.5 * (f[1:] + f[:-1]) * np.diff(z)))
    return m2 ** -0.5


_ACT_CST = _silu_second_moment_const()


def _se3_divfree_kernel(pos_ref, feat_ref, w1_ref, w2slab_ref, out_ref, *,
                        bblk, n, c_in, num_basis, hidden, max_radius, act_cst):
    f32 = jnp.float32
    E = bblk * n * n                               # dense ordered-pair edges in this block

    pos = pos_ref[...]                             # (Bb, N, 3)
    feat = feat_ref[...]                           # (Bb, N, C)

    # ---- pairwise geometry, per-component columns (no XLU lane reduce) ----
    # rel[b, dst, src] = pos[b, src] - pos[b, dst]
    def pair_diff(col):                            # col: (Bb, N, 1)
        return (col[:, None, :, :] - col[:, :, None, :]).reshape(E, 1)

    dx = pair_diff(pos[:, :, 0:1])
    dy = pair_diff(pos[:, :, 1:2])
    dz = pair_diff(pos[:, :, 2:3])
    dist2 = dx * dx + dy * dy + dz * dz            # (E, 1)
    dist = jnp.sqrt(dist2)

    # Edge predicate: not a self edge (diagonal is exactly 0 by construction)
    # and within max_radius.  Coincident distinct nodes get a zero radial
    # embedding anyway, so dropping them is output-identical.
    valid = jnp.logical_and(dist2 > 0.0, dist < max_radius)

    # smooth cutoff * edge mask: soft_unit_step(10*(1-d/r)) = exp(-1/(10*(1-d/r))), d<r
    t = 10.0 * (1.0 - dist * (1.0 / max_radius))
    t_safe = jnp.where(valid, t, 1.0)
    cut_e = jnp.where(valid, jnp.exp(-1.0 / t_safe), 0.0)           # (E, 1)

    # ---- radial embedding: soft_one_hot_linspace('smooth_finite', cutoff=True) ----
    # (the *sqrt(num_basis) factor cancels exactly against fc layer 1's 1/sqrt(num_basis))
    step = max_radius / (num_basis + 1)
    centers = (lax.broadcasted_iota(jnp.int32, (1, num_basis), 1).astype(f32) + 1.0) * step
    diff = (dist - centers) * (1.0 / step)                          # (E, NB)
    u = diff + 1.0
    v = 1.0 - diff
    inside = jnp.logical_and(u > 0.0, v > 0.0)
    u_s = jnp.where(inside, u, 1.0)
    v_s = jnp.where(inside, v, 1.0)
    emb = jnp.where(inside, EMB_CONST * jnp.exp(-(1.0 / u_s + 1.0 / v_s)), 0.0)

    # ---- FullyConnectedNet layer 1 + normalized SiLU (constants folded) ----
    h_pre = jnp.dot(emb, w1_ref[...], preferred_element_type=f32)   # (E, H)
    h = (act_cst / math.sqrt(hidden * c_in)) * h_pre * jax.nn.sigmoid(h_pre)
    hc = cut_e * h                                                  # cutoff folded in

    # ---- fc layer 2 fused with the live 0e tensor-product path AND the curl
    # combination: host-folded j-major slab, hw[e, j*C + i]. Single MXU matmul.
    hw = jnp.dot(hc, w2slab_ref[...], preferred_element_type=f32)   # (E, 3*C)

    # ---- src-node features broadcast over dst (no gather matmul) ----
    x_src = jnp.broadcast_to(feat[:, None, :, :], (bblk, n, n, c_in)).reshape(E, c_in)

    # ---- per-edge curl components: lane-dense multiply + lane reduce; then the
    # cutoff-weighted scatter-add onto dst nodes = sum over the src axis.
    # TODO(synk): the 16x1o potential block and the l=1/l=2 spherical harmonics of
    # the torch module provably never influence the returned curl and are elided.
    cols = []
    for j in range(3):
        pj = x_src * hw[:, j * c_in:(j + 1) * c_in]                 # (E, C)
        cols.append(jnp.sum(pj, axis=-1, keepdims=True))            # (E, 1)
    curl_e = jnp.concatenate(cols, axis=-1)                          # (E, 3)
    out_ref[...] = jnp.sum(curl_e.reshape(bblk, n, n, 3), axis=2)    # (Bb, N, 3)


def se3_divfree_forward(node_features, pos, w1, w2):
    B, N, C = node_features.shape
    assert pos.shape == (B, N, 3)
    assert C == C_IN
    assert w1.shape == (NUM_BASIS, HIDDEN_DIM)
    assert w2.shape == (HIDDEN_DIM, WEIGHT_NUMEL)
    # Dense masked all-pairs edges match radius_graph exactly only below
    # torch_cluster's default max_num_neighbors=32 cap.
    assert N <= 33, "dense edge set diverges from radius_graph for N > 33"

    f32 = jnp.float32
    feat = node_features.astype(f32)
    pos_f = pos.astype(f32)
    w1_f = w1.astype(f32)

    # ---- host-side weight folding (layout plumbing, done once) ----
    # psi -> curl:  curl_j = sum_m psi_m * CURL_M[m, j]
    curl_m = jnp.array([[0.0, 1.0, -1.0],
                        [-1.0, 0.0, 1.0],
                        [1.0, -1.0, 0.0]], dtype=f32)
    # live 0e path of the per-edge tensor-product weights: w2[k, i*32 + m], m < 3
    w2_live = w2[:, :C_IN * MUL_0E].reshape(HIDDEN_DIM, C_IN, MUL_0E)[:, :, :3]
    wc = jnp.einsum('kim,mj->kij', w2_live.astype(f32), curl_m)      # (H, C, 3)
    # j-major slab so the channel index lands in output lanes: w2slab[k, j*C+i] = wc[k,i,j]
    w2slab = jnp.transpose(wc, (0, 2, 1)).reshape(HIDDEN_DIM, 3 * C_IN)

    # ---- generation-aware batch blocking ----
    try:
        vmem_cap = int(pltpu.get_tpu_info().vmem_capacity_bytes)
    except Exception:
        vmem_cap = 64 * 1024 * 1024
    if vmem_cap >= 100 * 1024 * 1024:      # v5e / v6e: 128 MiB VMEM per core
        edges_budget, vmem_limit = 16384, 80 * 1024 * 1024
    else:                                  # v7x: 64 MiB VMEM per core
        edges_budget, vmem_limit = 8192, 40 * 1024 * 1024

    bblk = max(1, min(B, edges_budget // (N * N)))
    if B >= 2:
        # keep >= 2 grid steps so both v7x TensorCores get work via the
        # "parallel" axis; an extra ~0.35us step is noise on single-core chips.
        bblk = min(bblk, pl.cdiv(B, 2))
    num_blocks = pl.cdiv(B, bblk)
    b_pad = num_blocks * bblk
    if b_pad != B:                         # zero-padded tail instead of a divisor search
        feat = jnp.pad(feat, ((0, b_pad - B), (0, 0), (0, 0)))
        pos_f = jnp.pad(pos_f, ((0, b_pad - B), (0, 0), (0, 0)))
    # TODO(synk): for large N add a dst-node tiling grid axis (per-step edge count is N^2).

    e_tot = b_pad * N * N
    cost = pl.CostEstimate(
        flops=int(2 * e_tot * NUM_BASIS * HIDDEN_DIM                # emb @ w1
                  + 2 * e_tot * HIDDEN_DIM * 3 * C_IN               # hc @ w2slab
                  + e_tot * (3 * HIDDEN_DIM + 8 * C_IN + 8 * NUM_BASIS + 40)),
        transcendentals=int(e_tot * (NUM_BASIS + HIDDEN_DIM + 3)),
        bytes_accessed=int(4 * (pos_f.size + feat.size + w1_f.size + w2slab.size
                                + b_pad * N * 3)),
    )

    kernel = functools.partial(
        _se3_divfree_kernel, bblk=bblk, n=N, c_in=C, num_basis=NUM_BASIS,
        hidden=HIDDEN_DIM, max_radius=MAX_RADIUS, act_cst=_ACT_CST)

    out = pl.pallas_call(
        kernel,
        out_shape=jax.ShapeDtypeStruct((b_pad, N, 3), jnp.float32),
        grid_spec=pltpu.PrefetchScalarGridSpec(
            num_scalar_prefetch=0,
            grid=(num_blocks,),
            in_specs=[
                pl.BlockSpec((bblk, N, 3), lambda b: (b, 0, 0)),
                pl.BlockSpec((bblk, N, C_IN), lambda b: (b, 0, 0)),
                pl.BlockSpec((NUM_BASIS, HIDDEN_DIM), lambda b: (0, 0)),
                pl.BlockSpec((HIDDEN_DIM, 3 * C_IN), lambda b: (0, 0)),
            ],
            out_specs=pl.BlockSpec((bblk, N, 3), lambda b: (b, 0, 0)),
        ),
        compiler_params=pltpu.CompilerParams(
            dimension_semantics=("parallel",),
            vmem_limit_bytes=vmem_limit),
        cost_estimate=cost,
    )(pos_f, feat, w1_f, w2slab)
    return out[:B]


if __name__ == "__main__":
    key = jax.random.PRNGKey(0)
    kf, kp, k1, k2 = jax.random.split(key, 4)
    B, N = 2, 8
    node_features = jax.random.normal(kf, (B, N, C_IN), dtype=jnp.float32)
    pos = jax.random.normal(kp, (B, N, 3), dtype=jnp.float32)
    # e3nn FullyConnectedNet parameters are unit-normal (fan-in scaling applied at call time).
    fc_w1 = jax.random.normal(k1, (NUM_BASIS, HIDDEN_DIM), dtype=jnp.float32)
    fc_w2 = jax.random.normal(k2, (HIDDEN_DIM, WEIGHT_NUMEL), dtype=jnp.float32)

    out = se3_divfree_forward(node_features, pos, fc_w1, fc_w2)
    jax.block_until_ready(out)
    assert out.shape == (B, N, 3) and out.dtype == jnp.float32
    print("KERNEL_OK")
</pallas_src>

<mosaic_0001>
module attributes {stable_mosaic.version = 11 : i64} {
  func.func @_se3_divfree_kernel(%arg0: i32, %arg1: memref<1x8x3xf32, #tpu.memory_space<vmem>>, %arg2: memref<1x8x16xf32, #tpu.memory_space<vmem>>, %arg3: memref<10x32xf32, #tpu.memory_space<vmem>>, %arg4: memref<32x48xf32, #tpu.memory_space<vmem>>, %arg5: memref<1x8x3xf32, #tpu.memory_space<vmem>>) attributes {dimension_semantics = [#tpu.dimension_semantics<parallel>], iteration_bounds = array<i64: 2>, scalar_prefetch = 0 : i64, scratch_operands = 0 : i64, tpu.core_type = #tpu.core_type<tc>, window_params = [{transform_indices = @transform_0, window_bounds = array<i64: 1, 8, 3>}, {transform_indices = @transform_1, window_bounds = array<i64: 1, 8, 16>}, {pipeline_mode = #tpu.pipeline_mode<synchronous>, transform_indices = @transform_2, window_bounds = array<i64: 10, 32>}, {pipeline_mode = #tpu.pipeline_mode<synchronous>, transform_indices = @transform_3, window_bounds = array<i64: 32, 48>}, {transform_indices = @transform_4, window_bounds = array<i64: 1, 8, 3>}]} {
    %c0 = arith.constant 0 : index
    %c0_0 = arith.constant 0 : index
    %c0_1 = arith.constant 0 : index
    %0 = vector.load %arg1[%c0, %c0_0, %c0_1] : memref<1x8x3xf32, #tpu.memory_space<vmem>>, vector<1x8x3xf32>
    %c0_2 = arith.constant 0 : index
    %c0_3 = arith.constant 0 : index
    %c0_4 = arith.constant 0 : index
    %1 = vector.load %arg2[%c0_2, %c0_3, %c0_4] : memref<1x8x16xf32, #tpu.memory_space<vmem>>, vector<1x8x16xf32>
    %2 = vector.extract_strided_slice %0 {offsets = [0, 0, 0], sizes = [1, 8, 1], strides = [1, 1, 1]} : vector<1x8x3xf32> to vector<1x8x1xf32>
    %3 = vector.shape_cast %2 : vector<1x8x1xf32> to vector<1x1x8x1xf32>
    %4 = vector.shape_cast %2 : vector<1x8x1xf32> to vector<1x8x1x1xf32>
    %5 = vector.broadcast %3 : vector<1x1x8x1xf32> to vector<1x8x8x1xf32>
    %6 = vector.broadcast %4 : vector<1x8x1x1xf32> to vector<1x8x8x1xf32>
    %7 = arith.subf %5, %6 : vector<1x8x8x1xf32>
    %8 = vector.shape_cast %7 : vector<1x8x8x1xf32> to vector<64x1xf32>
    %9 = vector.extract_strided_slice %0 {offsets = [0, 0, 1], sizes = [1, 8, 1], strides = [1, 1, 1]} : vector<1x8x3xf32> to vector<1x8x1xf32>
    %10 = vector.shape_cast %9 : vector<1x8x1xf32> to vector<1x1x8x1xf32>
    %11 = vector.shape_cast %9 : vector<1x8x1xf32> to vector<1x8x1x1xf32>
    %12 = vector.broadcast %10 : vector<1x1x8x1xf32> to vector<1x8x8x1xf32>
    %13 = vector.broadcast %11 : vector<1x8x1x1xf32> to vector<1x8x8x1xf32>
    %14 = arith.subf %12, %13 : vector<1x8x8x1xf32>
    %15 = vector.shape_cast %14 : vector<1x8x8x1xf32> to vector<64x1xf32>
    %16 = vector.extract_strided_slice %0 {offsets = [0, 0, 2], sizes = [1, 8, 1], strides = [1, 1, 1]} : vector<1x8x3xf32> to vector<1x8x1xf32>
    %17 = vector.shape_cast %16 : vector<1x8x1xf32> to vector<1x1x8x1xf32>
    %18 = vector.shape_cast %16 : vector<1x8x1xf32> to vector<1x8x1x1xf32>
    %19 = vector.broadcast %17 : vector<1x1x8x1xf32> to vector<1x8x8x1xf32>
    %20 = vector.broadcast %18 : vector<1x8x1x1xf32> to vector<1x8x8x1xf32>
    %21 = arith.subf %19, %20 : vector<1x8x8x1xf32>
    %22 = vector.shape_cast %21 : vector<1x8x8x1xf32> to vector<64x1xf32>
    %23 = arith.mulf %8, %8 : vector<64x1xf32>
    %24 = arith.mulf %15, %15 : vector<64x1xf32>
    %25 = arith.addf %23, %24 : vector<64x1xf32>
    %26 = arith.mulf %22, %22 : vector<64x1xf32>
    %27 = arith.addf %25, %26 : vector<64x1xf32>
    %28 = math.sqrt %27 : vector<64x1xf32>
    %cst = arith.constant 0.000000e+00 : f32
    %29 = vector.broadcast %cst : f32 to vector<64x1xf32>
    %30 = arith.cmpf ogt, %27, %29 : vector<64x1xf32>
    %cst_5 = arith.constant 3.000000e+00 : f32
    %31 = vector.broadcast %cst_5 : f32 to vector<64x1xf32>
    %32 = arith.cmpf olt, %28, %31 : vector<64x1xf32>
    %33 = arith.andi %30, %32 : vector<64x1xi1>
    %cst_6 = arith.constant 0.333333343 : f32
    %34 = vector.broadcast %cst_6 : f32 to vector<64x1xf32>
    %35 = arith.mulf %28, %34 : vector<64x1xf32>
    %cst_7 = arith.constant 1.000000e+00 : f32
    %36 = vector.broadcast %cst_7 : f32 to vector<64x1xf32>
    %37 = arith.subf %36, %35 : vector<64x1xf32>
    %cst_8 = arith.constant 1.000000e+01 : f32
    %38 = vector.broadcast %cst_8 : f32 to vector<64x1xf32>
    %39 = arith.mulf %38, %37 : vector<64x1xf32>
    %cst_9 = arith.constant 1.000000e+00 : f32
    %40 = vector.broadcast %cst_9 : f32 to vector<64x1xf32>
    %41 = arith.select %33, %39, %40 : vector<64x1xi1>, vector<64x1xf32>
    %cst_10 = arith.constant -1.000000e+00 : f32
    %42 = vector.broadcast %cst_10 : f32 to vector<64x1xf32>
    %43 = arith.divf %42, %41 : vector<64x1xf32>
    %44 = math.exp %43 : vector<64x1xf32>
    %cst_11 = arith.constant 0.000000e+00 : f32
    %45 = vector.broadcast %cst_11 : f32 to vector<64x1xf32>
    %46 = arith.select %33, %44, %45 : vector<64x1xi1>, vector<64x1xf32>
    %47 = tpu.iota {dimensions = array<i32: 1>} : vector<1x10xi32>
    %48 = arith.sitofp %47 : vector<1x10xi32> to vector<1x10xf32>
    %cst_12 = arith.constant 1.000000e+00 : f32
    %49 = vector.broadcast %cst_12 : f32 to vector<1x10xf32>
    %50 = arith.addf %48, %49 : vector<1x10xf32>
    %cst_13 = arith.constant 0.272727281 : f32
    %51 = vector.broadcast %cst_13 : f32 to vector<1x10xf32>
    %52 = arith.mulf %50, %51 : vector<1x10xf32>
    %53 = vector.broadcast %28 : vector<64x1xf32> to vector<64x10xf32>
    %54 = vector.broadcast %52 : vector<1x10xf32> to vector<64x10xf32>
    %55 = arith.subf %53, %54 : vector<64x10xf32>
    %cst_14 = arith.constant 3.66666675 : f32
    %56 = vector.broadcast %cst_14 : f32 to vector<64x10xf32>
    %57 = arith.mulf %55, %56 : vector<64x10xf32>
    %cst_15 = arith.constant 1.000000e+00 : f32
    %58 = vector.broadcast %cst_15 : f32 to vector<64x10xf32>
    %59 = arith.addf %57, %58 : vector<64x10xf32>
    %cst_16 = arith.constant 1.000000e+00 : f32
    %60 = vector.broadcast %cst_16 : f32 to vector<64x10xf32>
    %61 = arith.subf %60, %57 : vector<64x10xf32>
    %cst_17 = arith.constant 0.000000e+00 : f32
    %62 = vector.broadcast %cst_17 : f32 to vector<64x10xf32>
    %63 = arith.cmpf ogt, %59, %62 : vector<64x10xf32>
    %cst_18 = arith.constant 0.000000e+00 : f32
    %64 = vector.broadcast %cst_18 : f32 to vector<64x10xf32>
    %65 = arith.cmpf ogt, %61, %64 : vector<64x10xf32>
    %66 = arith.andi %63, %65 : vector<64x10xi1>
    %cst_19 = arith.constant 1.000000e+00 : f32
    %67 = vector.broadcast %cst_19 : f32 to vector<64x10xf32>
    %68 = arith.select %66, %59, %67 : vector<64x10xi1>, vector<64x10xf32>
    %cst_20 = arith.constant 1.000000e+00 : f32
    %69 = vector.broadcast %cst_20 : f32 to vector<64x10xf32>
    %70 = arith.select %66, %61, %69 : vector<64x10xi1>, vector<64x10xf32>
    %cst_21 = arith.constant 1.000000e+00 : f32
    %71 = vector.broadcast %cst_21 : f32 to vector<64x10xf32>
    %72 = arith.divf %71, %68 : vector<64x10xf32>
    %cst_22 = arith.constant 1.000000e+00 : f32
    %73 = vector.broadcast %cst_22 : f32 to vector<64x10xf32>
    %74 = arith.divf %73, %70 : vector<64x10xf32>
    %75 = arith.addf %72, %74 : vector<64x10xf32>
    %cst_23 = arith.constant 0.000000e+00 : f32
    %76 = vector.broadcast %cst_23 : f32 to vector<64x10xf32>
    %77 = arith.subf %76, %75 : vector<64x10xf32>
    %78 = math.exp %77 : vector<64x10xf32>
    %cst_24 = arith.constant 8.43357276 : f32
    %79 = vector.broadcast %cst_24 : f32 to vector<64x10xf32>
    %80 = arith.mulf %79, %78 : vector<64x10xf32>
    %cst_25 = arith.constant 0.000000e+00 : f32
    %81 = vector.broadcast %cst_25 : f32 to vector<64x10xf32>
    %82 = arith.select %66, %80, %81 : vector<64x10xi1>, vector<64x10xf32>
    %c0_26 = arith.constant 0 : index
    %c0_27 = arith.constant 0 : index
    %83 = vector.load %arg3[%c0_26, %c0_27] : memref<10x32xf32, #tpu.memory_space<vmem>>, vector<10x32xf32>
    %cst_28 = arith.constant dense<0.000000e+00> : vector<64x32xf32>
    %84 = tpu.matmul %82, %83, %cst_28 {dimension_numbers = #tpu.dot_dimension_numbers<[1], [0], [0], [1], [0, 0, 1, 1], [], []>} : vector<64x10xf32>, vector<10x32xf32>, vector<64x32xf32> -> vector<64x32xf32>
    %cst_29 = arith.constant 0.0740929693 : f32
    %85 = vector.broadcast %cst_29 : f32 to vector<64x32xf32>
    %86 = arith.mulf %85, %84 : vector<64x32xf32>
    %87 = arith.negf %84 : vector<64x32xf32>
    %88 = math.exp %87 : vector<64x32xf32>
    %cst_30 = arith.constant 1.000000e+00 : f32
    %89 = vector.broadcast %cst_30 : f32 to vector<64x32xf32>
    %90 = arith.addf %89, %88 : vector<64x32xf32>
    %91 = arith.divf %89, %90 : vector<64x32xf32>
    %92 = arith.mulf %86, %91 : vector<64x32xf32>
    %93 = vector.broadcast %46 : vector<64x1xf32> to vector<64x32xf32>
    %94 = arith.mulf %93, %92 : vector<64x32xf32>
    %c0_31 = arith.constant 0 : index
    %c0_32 = arith.constant 0 : index
    %95 = vector.load %arg4[%c0_31, %c0_32] : memref<32x48xf32, #tpu.memory_space<vmem>>, vector<32x48xf32>
    %cst_33 = arith.constant dense<0.000000e+00> : vector<64x48xf32>
    %96 = tpu.matmul %94, %95, %cst_33 {dimension_numbers = #tpu.dot_dimension_numbers<[1], [0], [0], [1], [0, 0, 1, 1], [], []>} : vector<64x32xf32>, vector<32x48xf32>, vector<64x48xf32> -> vector<64x48xf32>
    %97 = vector.shape_cast %1 : vector<1x8x16xf32> to vector<1x1x8x16xf32>
    %98 = vector.shape_cast %97 : vector<1x1x8x16xf32> to vector<1x1x8x16xf32>
    %99 = vector.broadcast %98 : vector<1x1x8x16xf32> to vector<1x8x8x16xf32>
    %100 = vector.shape_cast %99 : vector<1x8x8x16xf32> to vector<64x16xf32>
    %101 = vector.extract_strided_slice %96 {offsets = [0, 0], sizes = [64, 16], strides = [1, 1]} : vector<64x48xf32> to vector<64x16xf32>
    %102 = arith.mulf %100, %101 : vector<64x16xf32>
    %cst_34 = arith.constant dense<0.000000e+00> : vector<64xf32>
    %103 = vector.multi_reduction <add>, %102, %cst_34 [1] : vector<64x16xf32> to vector<64xf32>
    %104 = vector.shape_cast %103 : vector<64xf32> to vector<64x1xf32>
    %105 = vector.extract_strided_slice %96 {offsets = [0, 16], sizes = [64, 16], strides = [1, 1]} : vector<64x48xf32> to vector<64x16xf32>
    %106 = arith.mulf %100, %105 : vector<64x16xf32>
    %cst_35 = arith.constant dense<0.000000e+00> : vector<64xf32>
    %107 = vector.multi_reduction <add>, %106, %cst_35 [1] : vector<64x16xf32> to vector<64xf32>
    %108 = vector.shape_cast %107 : vector<64xf32> to vector<64x1xf32>
    %109 = vector.extract_strided_slice %96 {offsets = [0, 32], sizes = [64, 16], strides = [1, 1]} : vector<64x48xf32> to vector<64x16xf32>
    %110 = arith.mulf %100, %109 : vector<64x16xf32>
    %cst_36 = arith.constant dense<0.000000e+00> : vector<64xf32>
    %111 = vector.multi_reduction <add>, %110, %cst_36 [1] : vector<64x16xf32> to vector<64xf32>
    %112 = vector.shape_cast %111 : vector<64xf32> to vector<64x1xf32>
    %113 = tpu.concatenate %104, %108, %112 in 1 : vector<64x1xf32>, vector<64x1xf32>, vector<64x1xf32> -> vector<64x3xf32>
    %114 = vector.shape_cast %113 : vector<64x3xf32> to vector<1x8x8x3xf32>
    %cst_37 = arith.constant dense<0.000000e+00> : vector<1x8x3xf32>
    %115 = vector.multi_reduction <add>, %114, %cst_37 [2] : vector<1x8x8x3xf32> to vector<1x8x3xf32>
    %c0_38 = arith.constant 0 : index
    %c0_39 = arith.constant 0 : index
    %c0_40 = arith.constant 0 : index
    %116 = vector.load %arg5[%c0_38, %c0_39, %c0_40] : memref<1x8x3xf32, #tpu.memory_space<vmem>>, vector<1x8x3xf32>
    tpu.vector_store %arg5[%c0_38, %c0_39, %c0_40], %115 {strides = array<i32>} : memref<1x8x3xf32, #tpu.memory_space<vmem>>, vector<1x8x3xf32>,
    return
  }
  func.func @transform_0(%arg0: i32) -> (i32, i32, i32) {
    %c0_i32 = arith.constant 0 : i32
    %c0_i32_0 = arith.constant 0 : i32
    %c0_i32_1 = arith.constant 0 : i32
    return %arg0, %c0_i32, %c0_i32_0 : i32, i32, i32
  }
  func.func @transform_1(%arg0: i32) -> (i32, i32, i32) {
    %c0_i32 = arith.constant 0 : i32
    %c0_i32_0 = arith.constant 0 : i32
    %c0_i32_1 = arith.constant 0 : i32
    return %arg0, %c0_i32, %c0_i32_0 : i32, i32, i32
  }
  func.func @transform_2(%arg0: i32) -> (i32, i32) {
    %c0_i32 = arith.constant 0 : i32
    %c0_i32_0 = arith.constant 0 : i32
    %c0_i32_1 = arith.constant 0 : i32
    return %c0_i32, %c0_i32_0 : i32, i32
  }
  func.func @transform_3(%arg0: i32) -> (i32, i32) {
    %c0_i32 = arith.constant 0 : i32
    %c0_i32_0 = arith.constant 0 : i32
    %c0_i32_1 = arith.constant 0 : i32
    return %c0_i32, %c0_i32_0 : i32, i32
  }
  func.func @transform_4(%arg0: i32) -> (i32, i32, i32) {
    %c0_i32 = arith.constant 0 : i32
    %c0_i32_0 = arith.constant 0 : i32
    %c0_i32_1 = arith.constant 0 : i32
    return %arg0, %c0_i32, %c0_i32_0 : i32, i32, i32
  }
}

</mosaic_0001>

<llo_original>
// kernel: tpu_custom_call.1
$region0: #{tpu_custom_call.1}
  #allocation0 [shape = 'u32[]', space=smem, size = 0x4, offset = 0x4, fixed_abs, tag = 'smem constant byte address 0x4 - core index']
  #allocation1 [shape = 'u32[144,128]{1,0:T(1,128)}', space=vmem, size = 0x12000, scoped, tag = 'internal scratch']
  %s0 = inlined_call_operand.vmem [shape: f32[2,8,3], index: 0, kind: input, shape index: {}]
  %s1 = inlined_call_operand.vmem [shape: f32[2,8,16], index: 1, kind: input, shape index: {}]
  %s2 = inlined_call_operand.hbm [shape: f32[10,32], index: 2, kind: input, shape index: {}]
  %s3 = inlined_call_operand.hbm [shape: f32[32,48], index: 3, kind: input, shape index: {}]
  %s4 = inlined_call_operand.vmem [shape: f32[2,8,3], index: 4, kind: output, shape index: {}]
  %s5 = sld [smem:[#allocation0]]
  $region57: #{tpu_custom_call.1} parent=0
    _
  %s7 = ssub.s32 1, %s5
  %s8 = scalar_select 0, %s7, %s5
  $region1: #{tpu_custom_call.1} parent=0
    #allocation2 [shape = 'u8[8192]{0}', space=vmem, size = 0x2000, scoped, tag = 'input window, operand 2, single buffered']
    #allocation3 [shape = 's32[2]{0}', space=sflag, size = 0x8, scoped, tag = 'scoped memory for tpu_custom_call.1']
    #allocation4 [shape = 'u8[16384]{0}', space=vmem, size = 0x4000, scoped, tag = 'input window, operand 3, single buffered']
    #allocation5 [shape = 's32[1]{0}', space=sflag, size = 0x4, scoped, tag = 'scoped memory for tpu_custom_call.1']
    %9 = vsyncpa [#allocation3], 0
    %10 = vsyncpa [#allocation5], 0
    loop: start=0, step=1, limit=4
    $region2: #{tpu_custom_call.1} parent=1 // loop_pre_header
      _
    $region3: #{tpu_custom_call.1} parent=1 // loop_header
      %s12 = sphi 0, %s16
      %p13 = scmp.ge.s32.totalorder %s12, 4
      %s22 = sphi 0, %s24
      %s25 = sphi 0, %s22
      %s26 = sphi 0, %s25
      %s42 = sphi 0, %s26
      %s48 = sphi 0, %s50
      %s51 = sphi 0, %s48
      %s52 = sphi 0, %s51
      %s68 = sphi 0, %s52
      %s72 = sphi 0, %s72
      %s74 = sphi 0, %s72
      %s75 = sphi 0, %s74
      %s89 = sphi 0, %s75
      %s93 = sphi 0, %s93
      %s95 = sphi 0, %s93
      %s96 = sphi 0, %s95
      %s110 = sphi 0, %s96
      %s116 = sphi 0, %s118
      %s119 = sphi 0, %s116
      %s120 = sphi 0, %s119
      %s136 = sphi 0, %s120
    $region4: #{tpu_custom_call.1} parent=1 // loop_header_branch
      %15 = sbr.rel (%p13) target = $region8
    $region5: #{tpu_custom_call.1} parent=1 // loop_body
      %s17 = ssub.s32 %s12, 1
      %s18 = ssub.s32 %s12, 2
      %s19 = sadd.s32 %s12, 1
      %s20 = ssub.s32 %s12, %s19
      %p21 = scmp.eq.s32.totalorder %s20, 0
      %s23 = sadd.s32 %s22, 1
      %s24 = scalar_select %p21, %s22, %s23
      %p27 = pneg %p21
      %p28 = scmp.eq.s32.totalorder %s12, 1
      %p29 = por %p27, %p28
      %p30 = scmp.ne.s32.totalorder %s22, %s25
      %p31 = scmp.eq.s32.totalorder %s12, 0
      %p32 = por %p30, %p31
      %p33 = scmp.ne.s32.totalorder %s22, %s25
      %p34 = scmp.eq.s32.totalorder %s17, 1
      %p35 = por %p33, %p34
      %p36 = scmp.ne.s32.totalorder %s25, %s26
      %p37 = scmp.eq.s32.totalorder %s17, 0
      %p38 = por %p36, %p37
      %p39 = scmp.ne.s32.totalorder %s25, %s26
      %p40 = scmp.eq.s32.totalorder %s18, 1
      %p41 = por %p39, %p40
      %p43 = scmp.ne.s32.totalorder %s26, %s42
      %p44 = scmp.eq.s32.totalorder %s18, 0
      %p45 = por %p43, %p44
      %s46 = ssub.s32 %s12, %s19
      %p47 = scmp.eq.s32.totalorder %s46, 0
      %s49 = sadd.s32 %s48, 1
      %s50 = scalar_select %p47, %s48, %s49
      %p53 = pneg %p47
      %p54 = scmp.eq.s32.totalorder %s12, 1
      %p55 = por %p53, %p54
      %p56 = scmp.ne.s32.totalorder %s48, %s51
      %p57 = scmp.eq.s32.totalorder %s12, 0
      %p58 = por %p56, %p57
      %p59 = scmp.ne.s32.totalorder %s48, %s51
      %p60 = scmp.eq.s32.totalorder %s17, 1
      %p61 = por %p59, %p60
      %p62 = scmp.ne.s32.totalorder %s51, %s52
      %p63 = scmp.eq.s32.totalorder %s17, 0
      %p64 = por %p62, %p63
      %p65 = scmp.ne.s32.totalorder %s51, %s52
      %p66 = scmp.eq.s32.totalorder %s18, 1
      %p67 = por %p65, %p66
      %p69 = scmp.ne.s32.totalorder %s52, %s68
      %p70 = scmp.eq.s32.totalorder %s18, 0
      %p71 = por %p69, %p70
      %s73 = sadd.s32 %s72, 1
      %p76 = scmp.eq.s32.totalorder %s12, 1
      %p77 = scmp.ne.s32.totalorder %s72, %s74
      %p78 = scmp.eq.s32.totalorder %s12, 0
      %p79 = por %p77, %p78
      %p80 = scmp.ne.s32.totalorder %s72, %s74
      %p81 = scmp.eq.s32.totalorder %s17, 1
      %p82 = por %p80, %p81
      %p83 = scmp.ne.s32.totalorder %s74, %s75
      %p84 = scmp.eq.s32.totalorder %s17, 0
      %p85 = por %p83, %p84
      %p86 = scmp.ne.s32.totalorder %s74, %s75
      %p87 = scmp.eq.s32.totalorder %s18, 1
      %p88 = por %p86, %p87
      %p90 = scmp.ne.s32.totalorder %s75, %s89
      %p91 = scmp.eq.s32.totalorder %s18, 0
      %p92 = por %p90, %p91
      %s94 = sadd.s32 %s93, 1
      %p97 = scmp.eq.s32.totalorder %s12, 1
      %p98 = scmp.ne.s32.totalorder %s93, %s95
      %p99 = scmp.eq.s32.totalorder %s12, 0
      %p100 = por %p98, %p99
      %p101 = scmp.ne.s32.totalorder %s93, %s95
      %p102 = scmp.eq.s32.totalorder %s17, 1
      %p103 = por %p101, %p102
      %p104 = scmp.ne.s32.totalorder %s95, %s96
      %p105 = scmp.eq.s32.totalorder %s17, 0
      %p106 = por %p104, %p105
      %p107 = scmp.ne.s32.totalorder %s95, %s96
      %p108 = scmp.eq.s32.totalorder %s18, 1
      %p109 = por %p107, %p108
      %p111 = scmp.ne.s32.totalorder %s96, %s110
      %p112 = scmp.eq.s32.totalorder %s18, 0
      %p113 = por %p111, %p112
      %s114 = ssub.s32 %s12, %s19
      %p115 = scmp.eq.s32.totalorder %s114, 0
      %s117 = sadd.s32 %s116, 1
      %s118 = scalar_select %p115, %s116, %s117
      %p121 = pneg %p115
      %p122 = scmp.eq.s32.totalorder %s12, 1
      %p123 = por %p121, %p122
      %p124 = scmp.ne.s32.totalorder %s116, %s119
      %p125 = scmp.eq.s32.totalorder %s12, 0
      %p126 = por %p124, %p125
      %p127 = scmp.ne.s32.totalorder %s116, %s119
      %p128 = scmp.eq.s32.totalorder %s17, 1
      %p129 = por %p127, %p128
      %p130 = scmp.ne.s32.totalorder %s119, %s120
      %p131 = scmp.eq.s32.totalorder %s17, 0
      %p132 = por %p130, %p131
      %p133 = scmp.ne.s32.totalorder %s119, %s120
      %p134 = scmp.eq.s32.totalorder %s18, 1
      %p135 = por %p133, %p134
      %p137 = scmp.ne.s32.totalorder %s120, %s136
      %p138 = scmp.eq.s32.totalorder %s18, 0
      %p139 = por %p137, %p138
      %p140 = scmp.le.s32.totalorder 1, %s12
      %p141 = scmp.lt.s32.totalorder %s12, 3
      %p142 = pnand %p140, %p141
      %p143 = pneg %p142
      // Predicated region
      $region9: #{tpu_custom_call.1} parent=5 // pred_check
        _
      $region10: #{tpu_custom_call.1} parent=5 // pred_check_branch
        %145 = sbr.rel (%p142) target = $region12
      $region11: #{tpu_custom_call.1} parent=5 // pred_region
        %s146 = ssub.s32 %s12, 1
        // Predicated region
        $region13: #{tpu_custom_call.1} parent=11 // pred_check
          %p147 = pneg %p85
        $region14: #{tpu_custom_call.1} parent=11 // pred_check_branch
          %149 = sbr.rel (%p147) target = $region16
        $region15: #{tpu_custom_call.1} parent=11 // pred_region
          %s151 = ssub.s32 256, 256
          %152 = vsyncadd [#allocation3], %s151
          %s153 = sshll.u32 [#allocation2], 4
          %s154 = int_to_ptr.vmem [resolvable:$true] %s153
          %159 = dma.hbm_to_vmem [thread:$0]  %s2, 256, %s154, [#allocation3], 128, 128, 8
        $region16: #{tpu_custom_call.1} parent=11 // pred_fallthru
          _
        // Predicated region
        $region17: #{tpu_custom_call.1} parent=11 // pred_check
          %p160 = pneg %p106
        $region18: #{tpu_custom_call.1} parent=11 // pred_check_branch
          %162 = sbr.rel (%p160) target = $region20
        $region19: #{tpu_custom_call.1} parent=11 // pred_region
          %s164 = ssub.s32 512, 512
          %165 = vsyncadd [#allocation5], %s164
          %s166 = sshll.u32 [#allocation4], 4
          %s167 = int_to_ptr.vmem [resolvable:$true] %s166
          %172 = dma.hbm_to_vmem [thread:$0]  %s3, 512, %s167, [#allocation5], 128, 128, 8
        $region20: #{tpu_custom_call.1} parent=11 // pred_fallthru
          _
      $region12: #{tpu_custom_call.1} parent=5 // pred_fallthru
        _
      %p173 = scmp.lt.s32.totalorder %s12, 2
      // Predicated region
      $region21: #{tpu_custom_call.1} parent=5 // pred_check
        %p174 = pneg %p173
      $region22: #{tpu_custom_call.1} parent=5 // pred_check_branch
        %176 = sbr.rel (%p174) target = $region24
      $region23: #{tpu_custom_call.1} parent=5 // pred_region
        // Predicated region
        $region25: #{tpu_custom_call.1} parent=23 // pred_check
          %p177 = pneg %p32
        $region26: #{tpu_custom_call.1} parent=23 // pred_check_branch
          %179 = sbr.rel (%p177) target = $region28
        $region27: #{tpu_custom_call.1} parent=23 // pred_region
          %p180 = scmp.lt.s32.totalorder %s12, 1
          %s181 = scalar_select %p180, %s12, 1
          %s182 = smul.addr %s181, 8
          %s183 = scalar_lea.vmem %s0, %s182
        $region28: #{tpu_custom_call.1} parent=23 // pred_fallthru
          _
        // Predicated region
        $region29: #{tpu_custom_call.1} parent=23 // pred_check
          %p184 = pneg %p58
        $region30: #{tpu_custom_call.1} parent=23 // pred_check_branch
          %186 = sbr.rel (%p184) target = $region32
        $region31: #{tpu_custom_call.1} parent=23 // pred_region
          %p187 = scmp.lt.s32.totalorder %s12, 1
          %s188 = scalar_select %p187, %s12, 1
          %s189 = smul.addr %s188, 8
          %s190 = scalar_lea.vmem %s1, %s189
        $region32: #{tpu_custom_call.1} parent=23 // pred_fallthru
          _
      $region24: #{tpu_custom_call.1} parent=5 // pred_fallthru
        _
      %p191 = scmp.le.s32.totalorder 1, %s12
      %p192 = scmp.lt.s32.totalorder %s12, 3
      %p193 = pnand %p191, %p192
      %p194 = pneg %p193
      // Predicated region
      $region33: #{tpu_custom_call.1} parent=5 // pred_check
        _
      $region34: #{tpu_custom_call.1} parent=5 // pred_check_branch
        %196 = sbr.rel (%p193) target = $region36
      $region35: #{tpu_custom_call.1} parent=5 // pred_region
        %s197 = ssub.s32 %s12, 1
        // Predicated region
        $region37: #{tpu_custom_call.1} parent=35 // pred_check
          %p198 = pneg %p85
        $region38: #{tpu_custom_call.1} parent=35 // pred_check_branch
          %200 = sbr.rel (%p198) target = $region40
        $region39: #{tpu_custom_call.1} parent=35 // pred_region
          %201 = dma.done [#allocation3], 256
        $region40: #{tpu_custom_call.1} parent=35 // pred_fallthru
          _
        // Predicated region
        $region41: #{tpu_custom_call.1} parent=35 // pred_check
          %p202 = pneg %p106
        $region42: #{tpu_custom_call.1} parent=35 // pred_check_branch
          %204 = sbr.rel (%p202) target = $region44
        $region43: #{tpu_custom_call.1} parent=35 // pred_region
          %205 = dma.done [#allocation5], 512
        $region44: #{tpu_custom_call.1} parent=35 // pred_fallthru
          _
        %p206 = scmp.lt.s32.totalorder %s17, 1
        %s207 = scalar_select %p206, %s17, 1
        %s208 = smul.addr %s207, 8
        %s209 = scalar_lea.vmem %s0, %s208
        %p210 = pneg %p38
        %p211 = pneg %p35
        %p212 = scmp.lt.s32.totalorder %s17, 1
        %s213 = scalar_select %p212, %s17, 1
        %s214 = smul.addr %s213, 8
        %s215 = scalar_lea.vmem %s1, %s214
        %p216 = pneg %p64
        %p217 = pneg %p61
        %p218 = pneg %p85
        %p219 = pneg %p82
        %p220 = pneg %p106
        %p221 = pneg %p103
        %p222 = pneg %p132
        %p223 = pneg %p129
        %p224 = scmp.lt.s32.totalorder %s17, 1
        %s225 = scalar_select %p224, %s17, 1
        %s226 = smul.addr %s225, 8
        %s227 = scalar_lea.vmem %s4, %s226
        %p228 = scmp.lt.s32.totalorder %s17, 1
        %s229 = scalar_select %p228, %s17, 1
        %s230 = smul.addr %s229, 8
        %s231 = scalar_lea.vmem %s0, %s230
        %p232 = scmp.lt.s32.totalorder %s17, 1
        %s233 = scalar_select %p232, %s17, 1
        %s234 = smul.addr %s233, 8
        %s235 = scalar_lea.vmem %s1, %s234
        %p236 = scmp.lt.s32.totalorder %s17, 1
        %s237 = scalar_select %p236, %s17, 1
        %s238 = smul.addr %s237, 8
        %s239 = scalar_lea.vmem %s4, %s238
        %v240 = vld [vmem:[%s231] sm:$0xff]
        %v241 = vld [vmem:[%s235] sm:$0xff]
        %v243 = vcombine.high %v240, %v240
        %v245 = vunpack.c.l.s4 1966171168
        %v246 = vunpack.c.0.s8 %v245
        %v247 = vlaneseq
        %v248 = vshrl.u32 %v247, 7
        %v249 = vsub.s32 %v246, %v248
        %v250 = vrot.slane %v240, %v249
        %v252 = vunpack.c.l.s4 1966171168
        %v253 = vunpack.c.0.s8 %v252
        %v254 = vlaneseq
        %v255 = vshrl.u32 %v254, 7
        %v256 = vsub.s32 %v253, %v255
        %v257 = vrot.slane %v243, %v256
        %v258 = vcombine.high %v250, %v250
        %v259 = vcombine.high %v257, %v257
        %v261 = vunpack.c.l.s4 1966171168
        %v262 = vunpack.c.0.s8 %v261
        %v263 = vlaneseq
        %v264 = vshrl.u32 %v263, 7
        %v265 = vsub.s32 %v262, %v264
        %v266 = vrot.slane %v250, %v265
        %v268 = vunpack.c.l.s4 1966171168
        %v269 = vunpack.c.0.s8 %v268
        %v270 = vlaneseq
        %v271 = vshrl.u32 %v270, 7
        %v272 = vsub.s32 %v269, %v271
        %v273 = vrot.slane %v257, %v272
        %v275 = vunpack.c.l.s4 1966171168
        %v276 = vunpack.c.0.s8 %v275
        %v277 = vlaneseq
        %v278 = vshrl.u32 %v277, 7
        %v279 = vsub.s32 %v276, %v278
        %v280 = vrot.slane %v258, %v279
        %v282 = vunpack.c.l.s4 1966171168
        %v283 = vunpack.c.0.s8 %v282
        %v284 = vlaneseq
        %v285 = vshrl.u32 %v284, 7
        %v286 = vsub.s32 %v283, %v285
        %v287 = vrot.slane %v259, %v286
        %v288 = vcombine.high %v266, %v266
        %v289 = vcombine.high %v273, %v273
        %v290 = vcombine.high %v280, %v280
        %v291 = vcombine.high %v287, %v287
        %v292 = vlaneseq
        %v293 = vshrl.u32 %v292, 7
        %v294 = vsub.s32 0, %v293
        %v295 = vrot.slane %v266, %v294
        %v296 = vlaneseq
        %v297 = vshrl.u32 %v296, 7
        %v298 = vsub.s32 0, %v297
        %v299 = vrot.slane %v280, %v298
        %v300 = vlaneseq
        %v301 = vshrl.u32 %v300, 7
        %v302 = vsub.s32 0, %v301
        %v303 = vrot.slane %v288, %v302
        %v304 = vlaneseq
        %v305 = vshrl.u32 %v304, 7
        %v306 = vsub.s32 0, %v305
        %v307 = vrot.slane %v290, %v306
        %v308 = vlaneseq
        %v309 = vshrl.u32 %v308, 7
        %v310 = vsub.s32 0, %v309
        %v311 = vrot.slane %v273, %v310
        %v312 = vlaneseq
        %v313 = vshrl.u32 %v312, 7
        %v314 = vsub.s32 0, %v313
        %v315 = vrot.slane %v287, %v314
        %v316 = vlaneseq
        %v317 = vshrl.u32 %v316, 7
        %v318 = vsub.s32 0, %v317
        %v319 = vrot.slane %v289, %v318
        %v320 = vlaneseq
        %v321 = vshrl.u32 %v320, 7
        %v322 = vsub.s32 0, %v321
        %v323 = vrot.slane %v291, %v322
        %v332 = vsub.f32 %v240, %v295
        %v333 = vsub.f32 %v240, %v299
        %v334 = vsub.f32 %v240, %v303
        %v335 = vsub.f32 %v240, %v307
        %v336 = vsub.f32 %v240, %v311
        %v337 = vsub.f32 %v240, %v315
        %v338 = vsub.f32 %v240, %v319
        %v339 = vsub.f32 %v240, %v323
        %v340 = vmul.f32 %v332, %v332
        %v341 = vmul.f32 %v333, %v333
        %v342 = vmul.f32 %v334, %v334
        %v343 = vmul.f32 %v335, %v335
        %v344 = vmul.f32 %v336, %v336
        %v345 = vmul.f32 %v337, %v337
        %v346 = vmul.f32 %v338, %v338
        %v347 = vmul.f32 %v339, %v339
        %356 = vrot.lane.b32.xlu0 %v340, 127
        %v357 = vpop.permute.xlu0 %356
        %358 = vrot.lane.b32.xlu0 %v341, 127
        %v359 = vpop.permute.xlu0 %358
        %360 = vrot.lane.b32.xlu0 %v342, 127
        %v361 = vpop.permute.xlu0 %360
        %362 = vrot.lane.b32.xlu0 %v343, 127
        %v363 = vpop.permute.xlu0 %362
        %364 = vrot.lane.b32.xlu0 %v344, 127
        %v365 = vpop.permute.xlu0 %364
        %366 = vrot.lane.b32.xlu0 %v345, 127
        %v367 = vpop.permute.xlu0 %366
        %368 = vrot.lane.b32.xlu0 %v346, 127
        %v369 = vpop.permute.xlu0 %368
        %370 = vrot.lane.b32.xlu0 %v347, 127
        %v371 = vpop.permute.xlu0 %370
        %v380 = vadd.f32 %v340, %v357
        %v381 = vadd.f32 %v341, %v359
        %v382 = vadd.f32 %v342, %v361
        %v383 = vadd.f32 %v343, %v363
        %v384 = vadd.f32 %v344, %v365
        %v385 = vadd.f32 %v345, %v367
        %v386 = vadd.f32 %v346, %v369
        %v387 = vadd.f32 %v347, %v371
        %388 = vrot.lane.b32.xlu0 %v340, 126
        %v389 = vpop.permute.xlu0 %388
        %390 = vrot.lane.b32.xlu0 %v341, 126
        %v391 = vpop.permute.xlu0 %390
        %392 = vrot.lane.b32.xlu0 %v342, 126
        %v393 = vpop.permute.xlu0 %392
        %394 = vrot.lane.b32.xlu0 %v343, 126
        %v395 = vpop.permute.xlu0 %394
        %396 = vrot.lane.b32.xlu0 %v344, 126
        %v397 = vpop.permute.xlu0 %396
        %398 = vrot.lane.b32.xlu0 %v345, 126
        %v399 = vpop.permute.xlu0 %398
        %400 = vrot.lane.b32.xlu0 %v346, 126
        %v401 = vpop.permute.xlu0 %400
        %402 = vrot.lane.b32.xlu0 %v347, 126
        %v403 = vpop.permute.xlu0 %402
        %v412 = vadd.f32 %v380, %v389
        %v413 = vadd.f32 %v381, %v391
        %v414 = vadd.f32 %v382, %v393
        %v415 = vadd.f32 %v383, %v395
        %v416 = vadd.f32 %v384, %v397
        %v417 = vadd.f32 %v385, %v399
        %v418 = vadd.f32 %v386, %v401
        %v419 = vadd.f32 %v387, %v403
        %v420 = vrsqrt.pop %v412
        %v421 = vmul.f32 %v412, %v420
        %vm422 = vcmp.eq.f32.partialorder %v412, inf
        %v423 = vsel %vm422, %v412, %v421
        %vm424 = vcmp.eq.f32.partialorder %v412, 0.0
        %v425 = vand.u32 %v412, 2147483648
        %v426 = vsel %vm424, %v425, %v423
        %v427 = vrsqrt.pop %v413
        %v428 = vmul.f32 %v413, %v427
        %vm429 = vcmp.eq.f32.partialorder %v413, inf
        %v430 = vsel %vm429, %v413, %v428
        %vm431 = vcmp.eq.f32.partialorder %v413, 0.0
        %v432 = vand.u32 %v413, 2147483648
        %v433 = vsel %vm431, %v432, %v430
        %v434 = vrsqrt.pop %v414
        %v435 = vmul.f32 %v414, %v434
        %vm436 = vcmp.eq.f32.partialorder %v414, inf
        %v437 = vsel %vm436, %v414, %v435
        %vm438 = vcmp.eq.f32.partialorder %v414, 0.0
        %v439 = vand.u32 %v414, 2147483648
        %v440 = vsel %vm438, %v439, %v437
        %v441 = vrsqrt.pop %v415
        %v442 = vmul.f32 %v415, %v441
        %vm443 = vcmp.eq.f32.partialorder %v415, inf
        %v444 = vsel %vm443, %v415, %v442
        %vm445 = vcmp.eq.f32.partialorder %v415, 0.0
        %v446 = vand.u32 %v415, 2147483648
        %v447 = vsel %vm445, %v446, %v444
        %v448 = vrsqrt.pop %v416
        %v449 = vmul.f32 %v416, %v448
        %vm450 = vcmp.eq.f32.partialorder %v416, inf
        %v451 = vsel %vm450, %v416, %v449
        %vm452 = vcmp.eq.f32.partialorder %v416, 0.0
        %v453 = vand.u32 %v416, 2147483648
        %v454 = vsel %vm452, %v453, %v451
        %v455 = vrsqrt.pop %v417
        %v456 = vmul.f32 %v417, %v455
        %vm457 = vcmp.eq.f32.partialorder %v417, inf
        %v458 = vsel %vm457, %v417, %v456
        %vm459 = vcmp.eq.f32.partialorder %v417, 0.0
        %v460 = vand.u32 %v417, 2147483648
        %v461 = vsel %vm459, %v460, %v458
        %v462 = vrsqrt.pop %v418
        %v463 = vmul.f32 %v418, %v462
        %vm464 = vcmp.eq.f32.partialorder %v418, inf
        %v465 = vsel %vm464, %v418, %v463
        %vm466 = vcmp.eq.f32.partialorder %v418, 0.0
        %v467 = vand.u32 %v418, 2147483648
        %v468 = vsel %vm466, %v467, %v465
        %v469 = vrsqrt.pop %v419
        %v470 = vmul.f32 %v419, %v469
        %vm471 = vcmp.eq.f32.partialorder %v419, inf
        %v472 = vsel %vm471, %v419, %v470
        %vm473 = vcmp.eq.f32.partialorder %v419, 0.0
        %v474 = vand.u32 %v419, 2147483648
        %v475 = vsel %vm473, %v474, %v472
        %vm476 = vcmp.gt.f32.partialorder %v412, 0.0
        %vm477 = vcmp.gt.f32.partialorder %v413, 0.0
        %vm478 = vcmp.gt.f32.partialorder %v414, 0.0
        %vm479 = vcmp.gt.f32.partialorder %v415, 0.0
        %vm480 = vcmp.gt.f32.partialorder %v416, 0.0
        %vm481 = vcmp.gt.f32.partialorder %v417, 0.0
        %vm482 = vcmp.gt.f32.partialorder %v418, 0.0
        %vm483 = vcmp.gt.f32.partialorder %v419, 0.0
        %vm484 = vcmp.lt.f32.partialorder %v426, 3.0
        %vm485 = vcmp.lt.f32.partialorder %v433, 3.0
        %vm486 = vcmp.lt.f32.partialorder %v440, 3.0
        %vm487 = vcmp.lt.f32.partialorder %v447, 3.0
        %vm488 = vcmp.lt.f32.partialorder %v454, 3.0
        %vm489 = vcmp.lt.f32.partialorder %v461, 3.0
        %vm490 = vcmp.lt.f32.partialorder %v468, 3.0
        %vm491 = vcmp.lt.f32.partialorder %v475, 3.0
        %vm492 = vmand %vm476, %vm484
        %vm493 = vmand %vm477, %vm485
        %vm494 = vmand %vm478, %vm486
        %vm495 = vmand %vm479, %vm487
        %vm496 = vmand %vm480, %vm488
        %vm497 = vmand %vm481, %vm489
        %vm498 = vmand %vm482, %vm490
        %vm499 = vmand %vm483, %vm491
        %v500 = vmul.f32 %v426, 0.33333334
        %v501 = vmul.f32 %v433, 0.33333334
        %v502 = vmul.f32 %v440, 0.33333334
        %v503 = vmul.f32 %v447, 0.33333334
        %v504 = vmul.f32 %v454, 0.33333334
        %v505 = vmul.f32 %v461, 0.33333334
        %v506 = vmul.f32 %v468, 0.33333334
        %v507 = vmul.f32 %v475, 0.33333334
        %v508 = vsub.f32 1.0, %v500
        %v509 = vsub.f32 1.0, %v501
        %v510 = vsub.f32 1.0, %v502
        %v511 = vsub.f32 1.0, %v503
        %v512 = vsub.f32 1.0, %v504
        %v513 = vsub.f32 1.0, %v505
        %v514 = vsub.f32 1.0, %v506
        %v515 = vsub.f32 1.0, %v507
        %v516 = vmul.f32 %v508, 10.0
        %v517 = vmul.f32 %v509, 10.0
        %v518 = vmul.f32 %v510, 10.0
        %v519 = vmul.f32 %v511, 10.0
        %v520 = vmul.f32 %v512, 10.0
        %v521 = vmul.f32 %v513, 10.0
        %v522 = vmul.f32 %v514, 10.0
        %v523 = vmul.f32 %v515, 10.0
        %v524 = vsel %vm492, %v516, 1.0
        %v525 = vsel %vm493, %v517, 1.0
        %v526 = vsel %vm494, %v518, 1.0
        %v527 = vsel %vm495, %v519, 1.0
        %v528 = vsel %vm496, %v520, 1.0
        %v529 = vsel %vm497, %v521, 1.0
        %v530 = vsel %vm498, %v522, 1.0
        %v531 = vsel %vm499, %v523, 1.0
        %v532 = vrcp.pop %v524
        %v533 = vmul.f32 -1.0, %v532
        %v534 = vrcp.pop %v525
        %v535 = vmul.f32 -1.0, %v534
        %v536 = vrcp.pop %v526
        %v537 = vmul.f32 -1.0, %v536
        %v538 = vrcp.pop %v527
        %v539 = vmul.f32 -1.0, %v538
        %v540 = vrcp.pop %v528
        %v541 = vmul.f32 -1.0, %v540
        %v542 = vrcp.pop %v529
        %v543 = vmul.f32 -1.0, %v542
        %v544 = vrcp.pop %v530
        %v545 = vmul.f32 -1.0, %v544
        %v546 = vrcp.pop %v531
        %v547 = vmul.f32 -1.0, %v546
        %v548 = vmul.f32 %v533, 1.442695
        %v549 = vpow.pop %v548
        %v550 = vmul.f32 %v535, 1.442695
        %v551 = vpow.pop %v550
        %v552 = vmul.f32 %v537, 1.442695
        %v553 = vpow.pop %v552
        %v554 = vmul.f32 %v539, 1.442695
        %v555 = vpow.pop %v554
        %v556 = vmul.f32 %v541, 1.442695
        %v557 = vpow.pop %v556
        %v558 = vmul.f32 %v543, 1.442695
        %v559 = vpow.pop %v558
        %v560 = vmul.f32 %v545, 1.442695
        %v561 = vpow.pop %v560
        %v562 = vmul.f32 %v547, 1.442695
        %v563 = vpow.pop %v562
        %v564 = vsel %vm492, %v549, 0.0
        %v565 = vsel %vm493, %v551, 0.0
        %v566 = vsel %vm494, %v553, 0.0
        %v567 = vsel %vm495, %v555, 0.0
        %v568 = vsel %vm496, %v557, 0.0
        %v569 = vsel %vm497, %v559, 0.0
        %v570 = vsel %vm498, %v561, 0.0
        %v571 = vsel %vm499, %v563, 0.0
        %v572 = vlaneseq
        %v573 = vand.u32 %v572, 127
        %v574 = vcvt.s32.f32 %v573
        %v575 = vadd.f32 %v574, 1.0
        %v576 = vmul.f32 %v575, 0.27272728
        %578 = vset.pattern.permute.xlu0 0
        %579 = vperm.xlu0 %578, %v426
        %v580 = vpop.permute.xlu0 %579
        %583 = vset.pattern.permute.xlu0 0
        %584 = vperm.xlu0 %583, %v433
        %v585 = vpop.permute.xlu0 %584
        %588 = vset.pattern.permute.xlu0 0
        %589 = vperm.xlu0 %588, %v440
        %v590 = vpop.permute.xlu0 %589
        %593 = vset.pattern.permute.xlu0 0
        %594 = vperm.xlu0 %593, %v447
        %v595 = vpop.permute.xlu0 %594
        %598 = vset.pattern.permute.xlu0 0
        %599 = vperm.xlu0 %598, %v454
        %v600 = vpop.permute.xlu0 %599
        %603 = vset.pattern.permute.xlu0 0
        %604 = vperm.xlu0 %603, %v461
        %v605 = vpop.permute.xlu0 %604
        %608 = vset.pattern.permute.xlu0 0
        %609 = vperm.xlu0 %608, %v468
        %v610 = vpop.permute.xlu0 %609
        %613 = vset.pattern.permute.xlu0 0
        %614 = vperm.xlu0 %613, %v475
        %v615 = vpop.permute.xlu0 %614
        %v617 = vsub.f32 %v580, %v576
        %v618 = vsub.f32 %v585, %v576
        %v619 = vsub.f32 %v590, %v576
        %v620 = vsub.f32 %v595, %v576
        %v621 = vsub.f32 %v600, %v576
        %v622 = vsub.f32 %v605, %v576
        %v623 = vsub.f32 %v610, %v576
        %v624 = vsub.f32 %v615, %v576
        %v625 = vmul.f32 %v617, 3.6666667
        %v626 = vmul.f32 %v618, 3.6666667
        %v627 = vmul.f32 %v619, 3.6666667
        %v628 = vmul.f32 %v620, 3.6666667
        %v629 = vmul.f32 %v621, 3.6666667
        %v630 = vmul.f32 %v622, 3.6666667
        %v631 = vmul.f32 %v623, 3.6666667
        %v632 = vmul.f32 %v624, 3.6666667
        %v633 = vadd.f32 %v625, 1.0
        %v634 = vadd.f32 %v626, 1.0
        %v635 = vadd.f32 %v627, 1.0
        %v636 = vadd.f32 %v628, 1.0
        %v637 = vadd.f32 %v629, 1.0
        %v638 = vadd.f32 %v630, 1.0
        %v639 = vadd.f32 %v631, 1.0
        %v640 = vadd.f32 %v632, 1.0
        %v641 = vsub.f32 1.0, %v625
        %v642 = vsub.f32 1.0, %v626
        %v643 = vsub.f32 1.0, %v627
        %v644 = vsub.f32 1.0, %v628
        %v645 = vsub.f32 1.0, %v629
        %v646 = vsub.f32 1.0, %v630
        %v647 = vsub.f32 1.0, %v631
        %v648 = vsub.f32 1.0, %v632
        %vm649 = vcmp.gt.f32.partialorder %v633, 0.0
        %vm650 = vcmp.gt.f32.partialorder %v634, 0.0
        %vm651 = vcmp.gt.f32.partialorder %v635, 0.0
        %vm652 = vcmp.gt.f32.partialorder %v636, 0.0
        %vm653 = vcmp.gt.f32.partialorder %v637, 0.0
        %vm654 = vcmp.gt.f32.partialorder %v638, 0.0
        %vm655 = vcmp.gt.f32.partialorder %v639, 0.0
        %vm656 = vcmp.gt.f32.partialorder %v640, 0.0
        %vm657 = vcmp.gt.f32.partialorder %v641, 0.0
        %vm658 = vcmp.gt.f32.partialorder %v642, 0.0
        %vm659 = vcmp.gt.f32.partialorder %v643, 0.0
        %vm660 = vcmp.gt.f32.partialorder %v644, 0.0
        %vm661 = vcmp.gt.f32.partialorder %v645, 0.0
        %vm662 = vcmp.gt.f32.partialorder %v646, 0.0
        %vm663 = vcmp.gt.f32.partialorder %v647, 0.0
        %vm664 = vcmp.gt.f32.partialorder %v648, 0.0
        %vm665 = vmand %vm649, %vm657
        %vm666 = vmand %vm650, %vm658
        %vm667 = vmand %vm651, %vm659
        %vm668 = vmand %vm652, %vm660
        %vm669 = vmand %vm653, %vm661
        %vm670 = vmand %vm654, %vm662
        %vm671 = vmand %vm655, %vm663
        %vm672 = vmand %vm656, %vm664
        %v673 = vsel %vm665, %v633, 1.0
        %v674 = vsel %vm666, %v634, 1.0
        %v675 = vsel %vm667, %v635, 1.0
        %v676 = vsel %vm668, %v636, 1.0
        %v677 = vsel %vm669, %v637, 1.0
        %v678 = vsel %vm670, %v638, 1.0
        %v679 = vsel %vm671, %v639, 1.0
        %v680 = vsel %vm672, %v640, 1.0
        %v681 = vsel %vm665, %v641, 1.0
        %v682 = vsel %vm666, %v642, 1.0
        %v683 = vsel %vm667, %v643, 1.0
        %v684 = vsel %vm668, %v644, 1.0
        %v685 = vsel %vm669, %v645, 1.0
        %v686 = vsel %vm670, %v646, 1.0
        %v687 = vsel %vm671, %v647, 1.0
        %v688 = vsel %vm672, %v648, 1.0
        %v689 = vrcp.pop %v673
        %v690 = vmul.f32 1.0, %v689
        %v691 = vrcp.pop %v674
        %v692 = vmul.f32 1.0, %v691
        %v693 = vrcp.pop %v675
        %v694 = vmul.f32 1.0, %v693
        %v695 = vrcp.pop %v676
        %v696 = vmul.f32 1.0, %v695
        %v697 = vrcp.pop %v677
        %v698 = vmul.f32 1.0, %v697
        %v699 = vrcp.pop %v678
        %v700 = vmul.f32 1.0, %v699
        %v701 = vrcp.pop %v679
        %v702 = vmul.f32 1.0, %v701
        %v703 = vrcp.pop %v680
        %v704 = vmul.f32 1.0, %v703
        %v705 = vrcp.pop %v681
        %v706 = vmul.f32 1.0, %v705
        %v707 = vrcp.pop %v682
        %v708 = vmul.f32 1.0, %v707
        %v709 = vrcp.pop %v683
        %v710 = vmul.f32 1.0, %v709
        %v711 = vrcp.pop %v684
        %v712 = vmul.f32 1.0, %v711
        %v713 = vrcp.pop %v685
        %v714 = vmul.f32 1.0, %v713
        %v715 = vrcp.pop %v686
        %v716 = vmul.f32 1.0, %v715
        %v717 = vrcp.pop %v687
        %v718 = vmul.f32 1.0, %v717
        %v719 = vrcp.pop %v688
        %v720 = vmul.f32 1.0, %v719
        %v721 = vadd.f32 %v690, %v706
        %v722 = vadd.f32 %v692, %v708
        %v723 = vadd.f32 %v694, %v710
        %v724 = vadd.f32 %v696, %v712
        %v725 = vadd.f32 %v698, %v714
        %v726 = vadd.f32 %v700, %v716
        %v727 = vadd.f32 %v702, %v718
        %v728 = vadd.f32 %v704, %v720
        %v729 = vsub.f32 0.0, %v721
        %v730 = vsub.f32 0.0, %v722
        %v731 = vsub.f32 0.0, %v723
        %v732 = vsub.f32 0.0, %v724
        %v733 = vsub.f32 0.0, %v725
        %v734 = vsub.f32 0.0, %v726
        %v735 = vsub.f32 0.0, %v727
        %v736 = vsub.f32 0.0, %v728
        %v737 = vmul.f32 %v729, 1.442695
        %v738 = vpow.pop %v737
        %v739 = vmul.f32 %v730, 1.442695
        %v740 = vpow.pop %v739
        %v741 = vmul.f32 %v731, 1.442695
        %v742 = vpow.pop %v741
        %v743 = vmul.f32 %v732, 1.442695
        %v744 = vpow.pop %v743
        %v745 = vmul.f32 %v733, 1.442695
        %v746 = vpow.pop %v745
        %v747 = vmul.f32 %v734, 1.442695
        %v748 = vpow.pop %v747
        %v749 = vmul.f32 %v735, 1.442695
        %v750 = vpow.pop %v749
        %v751 = vmul.f32 %v736, 1.442695
        %v752 = vpow.pop %v751
        %v753 = vmul.f32 %v738, 8.433573
        %v754 = vmul.f32 %v740, 8.433573
        %v755 = vmul.f32 %v742, 8.433573
        %v756 = vmul.f32 %v744, 8.433573
        %v757 = vmul.f32 %v746, 8.433573
        %v758 = vmul.f32 %v748, 8.433573
        %v759 = vmul.f32 %v750, 8.433573
        %v760 = vmul.f32 %v752, 8.433573
        %v761 = vsel %vm665, %v753, 0.0
        %v762 = vsel %vm666, %v754, 0.0
        %v763 = vsel %vm667, %v755, 0.0
        %v764 = vsel %vm668, %v756, 0.0
        %v765 = vsel %vm669, %v757, 0.0
        %v766 = vsel %vm670, %v758, 0.0
        %v767 = vsel %vm671, %v759, 0.0
        %v768 = vsel %vm672, %v760, 0.0
        %v769 = vld [vmem:[#allocation2] sm:$0xff]
        %v770 = vld [vmem:[#allocation2 + $0x8] sm:$0x3]
        %vm771 = vcmask 80896
        %v773 = vsel %vm771, %v761, 0
        %v776 = vsel %vm771, %v762, 0
        %v779 = vsel %vm771, %v763, 0
        %v782 = vsel %vm771, %v764, 0
        %v785 = vsel %vm771, %v765, 0
        %v788 = vsel %vm771, %v766, 0
        %v791 = vsel %vm771, %v767, 0
        %v794 = vsel %vm771, %v768, 0
        %vm796 = vcmask 1041408
        %v798 = vsel %vm796, %v770, 0
        %800 = vmatprep.subr.mxu0 0.0
        %801 = vmatpush1.msra.mxu0 0.0
        %802 = vmatprep.subr.mxu0 0.0
        %803 = vmatpush1.msra.mxu0 0.0
        %804 = vmatprep.subr.mxu0 0.0
        %805 = vmatpush1.msra.mxu0 0.0
        %806 = vmatprep.subr.mxu0 0.0
        %807 = vmatpush1.msra.mxu0 0.0
        %808 = vmatprep.subr.mxu0 0.0
        %809 = vmatpush1.msra.mxu0 0.0
        %810 = vmatprep.subr.mxu0 0.0
        %811 = vmatpush1.msra.mxu0 0.0
        %812 = vmatprep.subr.mxu0 0.0
        %813 = vmatpush1.msra.mxu0 0.0
        %814 = vmatprep.subr.mxu0 0.0
        %815 = vmatpush1.msra.mxu0 0.0
        %816 = vmatprep.subr.mxu0 0.0
        %817 = vmatpush1.msra.mxu0 0.0
        %818 = vmatprep.subr.mxu0 0.0
        %819 = vmatpush1.msra.mxu0 0.0
        %820 = vmatprep.subr.mxu0 0.0
        %821 = vmatpush1.msra.mxu0 0.0
        %822 = vmatprep.subr.mxu0 0.0
        %823 = vmatpush1.msra.mxu0 0.0
        %824 = vmatprep.subr.mxu0 0.0
        %825 = vmatpush1.msra.mxu0 0.0
        %826 = vmatprep.subr.mxu0 0.0
        %827 = vmatpush1.msra.mxu0 0.0
        %828 = vmatprep.subr.mxu0 0.0
        %829 = vmatpush1.msra.mxu0 %v798
        %830 = vmatprep.subr.mxu0 0.0
        %831 = vmatpush1.msra.mxu0 %v769
        %832 = vmatprep.subr.mxu0 0.0
        %833 = vmatpush2.msra.mxu0 0.0
        %834 = vmatprep.subr.mxu0 0.0
        %835 = vmatpush2.msra.mxu0 0.0
        %836 = vmatprep.subr.mxu0 0.0
        %837 = vmatpush2.msra.mxu0 0.0
        %838 = vmatprep.subr.mxu0 0.0
        %839 = vmatpush2.msra.mxu0 0.0
        %840 = vmatprep.subr.mxu0 0.0
        %841 = vmatpush2.msra.mxu0 0.0
        %842 = vmatprep.subr.mxu0 0.0
        %843 = vmatpush2.msra.mxu0 0.0
        %844 = vmatprep.subr.mxu0 0.0
        %845 = vmatpush2.msra.mxu0 0.0
        %846 = vmatprep.subr.mxu0 0.0
        %847 = vmatpush2.msra.mxu0 0.0
        %848 = vmatprep.subr.mxu0 0.0
        %849 = vmatpush2.msra.mxu0 0.0
        %850 = vmatprep.subr.mxu0 0.0
        %851 = vmatpush2.msra.mxu0 0.0
        %852 = vmatprep.subr.mxu0 0.0
        %853 = vmatpush2.msra.mxu0 0.0
        %854 = vmatprep.subr.mxu0 0.0
        %855 = vmatpush2.msra.mxu0 0.0
        %856 = vmatprep.subr.mxu0 0.0
        %857 = vmatpush2.msra.mxu0 0.0
        %858 = vmatprep.subr.mxu0 0.0
        %859 = vmatpush2.msra.mxu0 0.0
        %860 = vmatprep.subr.mxu0 0.0
        %861 = vmatpush2.msra.mxu0 0.0
        %862 = vmatprep.subr.mxu0 0.0
        %863 = vmatpush2.msra.mxu0 0.0
        %864 = vmatprep.mubr.f32.mxu0 0.0
        %865 = vmatmul.mubr.f32.gmra.mxu0 %v773
        %v866 = vpop.f32.mrf.mxu0
        %v867 = vadd.f32 0.0, %v866
        %v868 = vpop.f32.mrf.mxu0
        %869 = vmatprep.mubr.f32.mxu0 0.0
        %870 = vmatmul.mubr.f32.gmra.mxu0 %v776
        %v871 = vpop.f32.mrf.mxu0
        %v872 = vadd.f32 0.0, %v871
        %v873 = vpop.f32.mrf.mxu0
        %874 = vmatprep.mubr.f32.mxu0 0.0
        %875 = vmatmul.mubr.f32.gmra.mxu0 %v779
        %v876 = vpop.f32.mrf.mxu0
        %v877 = vadd.f32 0.0, %v876
        %v878 = vpop.f32.mrf.mxu0
        %879 = vmatprep.mubr.f32.mxu0 0.0
        %880 = vmatmul.mubr.f32.gmra.mxu0 %v782
        %v881 = vpop.f32.mrf.mxu0
        %v882 = vadd.f32 0.0, %v881
        %v883 = vpop.f32.mrf.mxu0
        %884 = vmatprep.mubr.f32.mxu0 0.0
        %885 = vmatmul.mubr.f32.gmra.mxu0 %v785
        %v886 = vpop.f32.mrf.mxu0
        %v887 = vadd.f32 0.0, %v886
        %v888 = vpop.f32.mrf.mxu0
        %889 = vmatprep.mubr.f32.mxu0 0.0
        %890 = vmatmul.mubr.f32.gmra.mxu0 %v788
        %v891 = vpop.f32.mrf.mxu0
        %v892 = vadd.f32 0.0, %v891
        %v893 = vpop.f32.mrf.mxu0
        %894 = vmatprep.mubr.f32.mxu0 0.0
        %895 = vmatmul.mubr.f32.gmra.mxu0 %v791
        %v896 = vpop.f32.mrf.mxu0
        %v897 = vadd.f32 0.0, %v896
        %v898 = vpop.f32.mrf.mxu0
        %899 = vmatprep.mubr.f32.mxu0 0.0
        %900 = vmatmul.mubr.f32.gmra.mxu0 %v794
        %v901 = vpop.f32.mrf.mxu0
        %v902 = vadd.f32 0.0, %v901
        %v903 = vpop.f32.mrf.mxu0
        %904 = vdwg.mxu0
        %v905 = vmul.f32 %v867, 0.07409297
        %v906 = vmul.f32 %v872, 0.07409297
        %v907 = vmul.f32 %v877, 0.07409297
        %v908 = vmul.f32 %v882, 0.07409297
        %v909 = vmul.f32 %v887, 0.07409297
        %v910 = vmul.f32 %v892, 0.07409297
        %v911 = vmul.f32 %v897, 0.07409297
        %v912 = vmul.f32 %v902, 0.07409297
        %v913 = vxor.u32 %v867, 2147483648
        %v914 = vxor.u32 %v872, 2147483648
        %v915 = vxor.u32 %v877, 2147483648
        %v916 = vxor.u32 %v882, 2147483648
        %v917 = vxor.u32 %v887, 2147483648
        %v918 = vxor.u32 %v892, 2147483648
        %v919 = vxor.u32 %v897, 2147483648
        %v920 = vxor.u32 %v902, 2147483648
        %v921 = vmul.f32 %v913, 1.442695
        %v922 = vpow.pop %v921
        %v923 = vmul.f32 %v914, 1.442695
        %v924 = vpow.pop %v923
        %v925 = vmul.f32 %v915, 1.442695
        %v926 = vpow.pop %v925
        %v927 = vmul.f32 %v916, 1.442695
        %v928 = vpow.pop %v927
        %v929 = vmul.f32 %v917, 1.442695
        %v930 = vpow.pop %v929
        %v931 = vmul.f32 %v918, 1.442695
        %v932 = vpow.pop %v931
        %v933 = vmul.f32 %v919, 1.442695
        %v934 = vpow.pop %v933
        %v935 = vmul.f32 %v920, 1.442695
        %v936 = vpow.pop %v935
        %v937 = vadd.f32 %v922, 1.0
        %v938 = vadd.f32 %v924, 1.0
        %v939 = vadd.f32 %v926, 1.0
        %v940 = vadd.f32 %v928, 1.0
        %v941 = vadd.f32 %v930, 1.0
        %v942 = vadd.f32 %v932, 1.0
        %v943 = vadd.f32 %v934, 1.0
        %v944 = vadd.f32 %v936, 1.0
        %v945 = vrcp.pop %v937
        %v946 = vmul.f32 1.0, %v945
        %v947 = vrcp.pop %v938
        %v948 = vmul.f32 1.0, %v947
        %v949 = vrcp.pop %v939
        %v950 = vmul.f32 1.0, %v949
        %v951 = vrcp.pop %v940
        %v952 = vmul.f32 1.0, %v951
        %v953 = vrcp.pop %v941
        %v954 = vmul.f32 1.0, %v953
        %v955 = vrcp.pop %v942
        %v956 = vmul.f32 1.0, %v955
        %v957 = vrcp.pop %v943
        %v958 = vmul.f32 1.0, %v957
        %v959 = vrcp.pop %v944
        %v960 = vmul.f32 1.0, %v959
        %v961 = vmul.f32 %v905, %v946
        %v962 = vmul.f32 %v906, %v948
        %v963 = vmul.f32 %v907, %v950
        %v964 = vmul.f32 %v908, %v952
        %v965 = vmul.f32 %v909, %v954
        %v966 = vmul.f32 %v910, %v956
        %v967 = vmul.f32 %v911, %v958
        %v968 = vmul.f32 %v912, %v960
        %970 = vset.pattern.permute.xlu0 0
        %971 = vperm.xlu0 %970, %v564
        %v972 = vpop.permute.xlu0 %971
        %975 = vset.pattern.permute.xlu0 0
        %976 = vperm.xlu0 %975, %v565
        %v977 = vpop.permute.xlu0 %976
        %980 = vset.pattern.permute.xlu0 0
        %981 = vperm.xlu0 %980, %v566
        %v982 = vpop.permute.xlu0 %981
        %985 = vset.pattern.permute.xlu0 0
        %986 = vperm.xlu0 %985, %v567
        %v987 = vpop.permute.xlu0 %986
        %990 = vset.pattern.permute.xlu0 0
        %991 = vperm.xlu0 %990, %v568
        %v992 = vpop.permute.xlu0 %991
        %995 = vset.pattern.permute.xlu0 0
        %996 = vperm.xlu0 %995, %v569
        %v997 = vpop.permute.xlu0 %996
        %1000 = vset.pattern.permute.xlu0 0
        %1001 = vperm.xlu0 %1000, %v570
        %v1002 = vpop.permute.xlu0 %1001
        %1005 = vset.pattern.permute.xlu0 0
        %1006 = vperm.xlu0 %1005, %v571
        %v1007 = vpop.permute.xlu0 %1006
        %v1009 = vmul.f32 %v972, %v961
        %v1010 = vmul.f32 %v977, %v962
        %v1011 = vmul.f32 %v982, %v963
        %v1012 = vmul.f32 %v987, %v964
        %v1013 = vmul.f32 %v992, %v965
        %v1014 = vmul.f32 %v997, %v966
        %v1015 = vmul.f32 %v1002, %v967
        %v1016 = vmul.f32 %v1007, %v968
        %v1017 = vld [vmem:[#allocation4] sm:$0xff]
        %v1018 = vld [vmem:[#allocation4 + $0x8] sm:$0xff]
        %v1019 = vld [vmem:[#allocation4 + $0x10] sm:$0xff]
        %v1020 = vld [vmem:[#allocation4 + $0x18] sm:$0xff]
        %vm1021 = vcmask 261120
        %v1023 = vsel %vm1021, %v1009, 0
        %v1026 = vsel %vm1021, %v1010, 0
        %v1029 = vsel %vm1021, %v1011, 0
        %v1032 = vsel %vm1021, %v1012, 0
        %v1035 = vsel %vm1021, %v1013, 0
        %v1038 = vsel %vm1021, %v1014, 0
        %v1041 = vsel %vm1021, %v1015, 0
        %v1044 = vsel %vm1021, %v1016, 0
        %1046 = vmatprep.subr.mxu0 0.0
        %1047 = vmatpush1.msra.mxu0 0.0
        %1048 = vmatprep.subr.mxu0 0.0
        %1049 = vmatpush1.msra.mxu0 0.0
        %1050 = vmatprep.subr.mxu0 0.0
        %1051 = vmatpush1.msra.mxu0 0.0
        %1052 = vmatprep.subr.mxu0 0.0
        %1053 = vmatpush1.msra.mxu0 0.0
        %1054 = vmatprep.subr.mxu0 0.0
        %1055 = vmatpush1.msra.mxu0 0.0
        %1056 = vmatprep.subr.mxu0 0.0
        %1057 = vmatpush1.msra.mxu0 0.0
        %1058 = vmatprep.subr.mxu0 0.0
        %1059 = vmatpush1.msra.mxu0 0.0
        %1060 = vmatprep.subr.mxu0 0.0
        %1061 = vmatpush1.msra.mxu0 0.0
        %1062 = vmatprep.subr.mxu0 0.0
        %1063 = vmatpush1.msra.mxu0 0.0
        %1064 = vmatprep.subr.mxu0 0.0
        %1065 = vmatpush1.msra.mxu0 0.0
        %1066 = vmatprep.subr.mxu0 0.0
        %1067 = vmatpush1.msra.mxu0 0.0
        %1068 = vmatprep.subr.mxu0 0.0
        %1069 = vmatpush1.msra.mxu0 0.0
        %1070 = vmatprep.subr.mxu0 0.0
        %1071 = vmatpush1.msra.mxu0 %v1020
        %1072 = vmatprep.subr.mxu0 0.0
        %1073 = vmatpush1.msra.mxu0 %v1019
        %1074 = vmatprep.subr.mxu0 0.0
        %1075 = vmatpush1.msra.mxu0 %v1018
        %1076 = vmatprep.subr.mxu0 0.0
        %1077 = vmatpush1.msra.mxu0 %v1017
        %1078 = vmatprep.subr.mxu0 0.0
        %1079 = vmatpush2.msra.mxu0 0.0
        %1080 = vmatprep.subr.mxu0 0.0
        %1081 = vmatpush2.msra.mxu0 0.0
        %1082 = vmatprep.subr.mxu0 0.0
        %1083 = vmatpush2.msra.mxu0 0.0
        %1084 = vmatprep.subr.mxu0 0.0
        %1085 = vmatpush2.msra.mxu0 0.0
        %1086 = vmatprep.subr.mxu0 0.0
        %1087 = vmatpush2.msra.mxu0 0.0
        %1088 = vmatprep.subr.mxu0 0.0
        %1089 = vmatpush2.msra.mxu0 0.0
        %1090 = vmatprep.subr.mxu0 0.0
        %1091 = vmatpush2.msra.mxu0 0.0
        %1092 = vmatprep.subr.mxu0 0.0
        %1093 = vmatpush2.msra.mxu0 0.0
        %1094 = vmatprep.subr.mxu0 0.0
        %1095 = vmatpush2.msra.mxu0 0.0
        %1096 = vmatprep.subr.mxu0 0.0
        %1097 = vmatpush2.msra.mxu0 0.0
        %1098 = vmatprep.subr.mxu0 0.0
        %1099 = vmatpush2.msra.mxu0 0.0
        %1100 = vmatprep.subr.mxu0 0.0
        %1101 = vmatpush2.msra.mxu0 0.0
        %1102 = vmatprep.subr.mxu0 0.0
        %1103 = vmatpush2.msra.mxu0 0.0
        %1104 = vmatprep.subr.mxu0 0.0
        %1105 = vmatpush2.msra.mxu0 0.0
        %1106 = vmatprep.subr.mxu0 0.0
        %1107 = vmatpush2.msra.mxu0 0.0
        %1108 = vmatprep.subr.mxu0 0.0
        %1109 = vmatpush2.msra.mxu0 0.0
        %1110 = vmatprep.mubr.f32.mxu0 0.0
        %1111 = vmatmul.mubr.f32.gmra.mxu0 %v1023
        %v1112 = vpop.f32.mrf.mxu0
        %v1113 = vadd.f32 0.0, %v1112
        %v1114 = vpop.f32.mrf.mxu0
        %1115 = vmatprep.mubr.f32.mxu0 0.0
        %1116 = vmatmul.mubr.f32.gmra.mxu0 %v1026
        %v1117 = vpop.f32.mrf.mxu0
        %v1118 = vadd.f32 0.0, %v1117
        %v1119 = vpop.f32.mrf.mxu0
        %1120 = vmatprep.mubr.f32.mxu0 0.0
        %1121 = vmatmul.mubr.f32.gmra.mxu0 %v1029
        %v1122 = vpop.f32.mrf.mxu0
        %v1123 = vadd.f32 0.0, %v1122
        %v1124 = vpop.f32.mrf.mxu0
        %1125 = vmatprep.mubr.f32.mxu0 0.0
        %1126 = vmatmul.mubr.f32.gmra.mxu0 %v1032
        %v1127 = vpop.f32.mrf.mxu0
        %v1128 = vadd.f32 0.0, %v1127
        %v1129 = vpop.f32.mrf.mxu0
        %1130 = vmatprep.mubr.f32.mxu0 0.0
        %1131 = vmatmul.mubr.f32.gmra.mxu0 %v1035
        %v1132 = vpop.f32.mrf.mxu0
        %v1133 = vadd.f32 0.0, %v1132
        %v1134 = vpop.f32.mrf.mxu0
        %1135 = vmatprep.mubr.f32.mxu0 0.0
        %1136 = vmatmul.mubr.f32.gmra.mxu0 %v1038
        %v1137 = vpop.f32.mrf.mxu0
        %v1138 = vadd.f32 0.0, %v1137
        %v1139 = vpop.f32.mrf.mxu0
        %1140 = vmatprep.mubr.f32.mxu0 0.0
        %1141 = vmatmul.mubr.f32.gmra.mxu0 %v1041
        %v1142 = vpop.f32.mrf.mxu0
        %v1143 = vadd.f32 0.0, %v1142
        %v1144 = vpop.f32.mrf.mxu0
        %1145 = vmatprep.mubr.f32.mxu0 0.0
        %1146 = vmatmul.mubr.f32.gmra.mxu0 %v1044
        %v1147 = vpop.f32.mrf.mxu0
        %v1148 = vadd.f32 0.0, %v1147
        %v1149 = vpop.f32.mrf.mxu0
        %1150 = vdwg.mxu0
        %v1151 = vmul.f32 %v241, %v1113
        %v1152 = vmul.f32 %v241, %v1118
        %v1153 = vmul.f32 %v241, %v1123
        %v1154 = vmul.f32 %v241, %v1128
        %v1155 = vmul.f32 %v241, %v1133
        %v1156 = vmul.f32 %v241, %v1138
        %v1157 = vmul.f32 %v241, %v1143
        %v1158 = vmul.f32 %v241, %v1148
        %vm1159 = vcmask 130048
        %v1160 = vsel %vm1159, %v1151, 0.0
        %1161 = vadd.xlane.f32.xlu0 %v1160
        %v1162 = vpop.xlane.xlu0 %1161
        %v1163 = vsel %vm1159, %v1152, 0.0
        %1164 = vadd.xlane.f32.xlu0 %v1163
        %v1165 = vpop.xlane.xlu0 %1164
        %v1166 = vsel %vm1159, %v1153, 0.0
        %1167 = vadd.xlane.f32.xlu0 %v1166
        %v1168 = vpop.xlane.xlu0 %1167
        %v1169 = vsel %vm1159, %v1154, 0.0
        %1170 = vadd.xlane.f32.xlu0 %v1169
        %v1171 = vpop.xlane.xlu0 %1170
        %v1172 = vsel %vm1159, %v1155, 0.0
        %1173 = vadd.xlane.f32.xlu0 %v1172
        %v1174 = vpop.xlane.xlu0 %1173
        %v1175 = vsel %vm1159, %v1156, 0.0
        %1176 = vadd.xlane.f32.xlu0 %v1175
        %v1177 = vpop.xlane.xlu0 %1176
        %v1178 = vsel %vm1159, %v1157, 0.0
        %1179 = vadd.xlane.f32.xlu0 %v1178
        %v1180 = vpop.xlane.xlu0 %1179
        %v1181 = vsel %vm1159, %v1158, 0.0
        %1182 = vadd.xlane.f32.xlu0 %v1181
        %v1183 = vpop.xlane.xlu0 %1182
        %1192 = vrot.lane.b32.xlu0 %v1113, 112
        %v1193 = vpop.permute.xlu0 %1192
        %1194 = vrot.lane.b32.xlu0 %v1118, 112
        %v1195 = vpop.permute.xlu0 %1194
        %1196 = vrot.lane.b32.xlu0 %v1123, 112
        %v1197 = vpop.permute.xlu0 %1196
        %1198 = vrot.lane.b32.xlu0 %v1128, 112
        %v1199 = vpop.permute.xlu0 %1198
        %1200 = vrot.lane.b32.xlu0 %v1133, 112
        %v1201 = vpop.permute.xlu0 %1200
        %1202 = vrot.lane.b32.xlu0 %v1138, 112
        %v1203 = vpop.permute.xlu0 %1202
        %1204 = vrot.lane.b32.xlu0 %v1143, 112
        %v1205 = vpop.permute.xlu0 %1204
        %1206 = vrot.lane.b32.xlu0 %v1148, 112
        %v1207 = vpop.permute.xlu0 %1206
        %v1216 = vmul.f32 %v241, %v1193
        %v1217 = vmul.f32 %v241, %v1195
        %v1218 = vmul.f32 %v241, %v1197
        %v1219 = vmul.f32 %v241, %v1199
        %v1220 = vmul.f32 %v241, %v1201
        %v1221 = vmul.f32 %v241, %v1203
        %v1222 = vmul.f32 %v241, %v1205
        %v1223 = vmul.f32 %v241, %v1207
        %v1224 = vsel %vm1159, %v1216, 0.0
        %1225 = vadd.xlane.f32.xlu0 %v1224
        %v1226 = vpop.xlane.xlu0 %1225
        %v1227 = vsel %vm1159, %v1217, 0.0
        %1228 = vadd.xlane.f32.xlu0 %v1227
        %v1229 = vpop.xlane.xlu0 %1228
        %v1230 = vsel %vm1159, %v1218, 0.0
        %1231 = vadd.xlane.f32.xlu0 %v1230
        %v1232 = vpop.xlane.xlu0 %1231
        %v1233 = vsel %vm1159, %v1219, 0.0
        %1234 = vadd.xlane.f32.xlu0 %v1233
        %v1235 = vpop.xlane.xlu0 %1234
        %v1236 = vsel %vm1159, %v1220, 0.0
        %1237 = vadd.xlane.f32.xlu0 %v1236
        %v1238 = vpop.xlane.xlu0 %1237
        %v1239 = vsel %vm1159, %v1221, 0.0
        %1240 = vadd.xlane.f32.xlu0 %v1239
        %v1241 = vpop.xlane.xlu0 %1240
        %v1242 = vsel %vm1159, %v1222, 0.0
        %1243 = vadd.xlane.f32.xlu0 %v1242
        %v1244 = vpop.xlane.xlu0 %1243
        %v1245 = vsel %vm1159, %v1223, 0.0
        %1246 = vadd.xlane.f32.xlu0 %v1245
        %v1247 = vpop.xlane.xlu0 %1246
        %1248 = vrot.lane.b32.xlu0 %v1113, 96
        %v1249 = vpop.permute.xlu0 %1248
        %1250 = vrot.lane.b32.xlu0 %v1118, 96
        %v1251 = vpop.permute.xlu0 %1250
        %1252 = vrot.lane.b32.xlu0 %v1123, 96
        %v1253 = vpop.permute.xlu0 %1252
        %1254 = vrot.lane.b32.xlu0 %v1128, 96
        %v1255 = vpop.permute.xlu0 %1254
        %1256 = vrot.lane.b32.xlu0 %v1133, 96
        %v1257 = vpop.permute.xlu0 %1256
        %1258 = vrot.lane.b32.xlu0 %v1138, 96
        %v1259 = vpop.permute.xlu0 %1258
        %1260 = vrot.lane.b32.xlu0 %v1143, 96
        %v1261 = vpop.permute.xlu0 %1260
        %1262 = vrot.lane.b32.xlu0 %v1148, 96
        %v1263 = vpop.permute.xlu0 %1262
        %v1272 = vmul.f32 %v241, %v1249
        %v1273 = vmul.f32 %v241, %v1251
        %v1274 = vmul.f32 %v241, %v1253
        %v1275 = vmul.f32 %v241, %v1255
        %v1276 = vmul.f32 %v241, %v1257
        %v1277 = vmul.f32 %v241, %v1259
        %v1278 = vmul.f32 %v241, %v1261
        %v1279 = vmul.f32 %v241, %v1263
        %v1280 = vsel %vm1159, %v1272, 0.0
        %1281 = vadd.xlane.f32.xlu0 %v1280
        %v1282 = vpop.xlane.xlu0 %1281
        %v1283 = vsel %vm1159, %v1273, 0.0
        %1284 = vadd.xlane.f32.xlu0 %v1283
        %v1285 = vpop.xlane.xlu0 %1284
        %v1286 = vsel %vm1159, %v1274, 0.0
        %1287 = vadd.xlane.f32.xlu0 %v1286
        %v1288 = vpop.xlane.xlu0 %1287
        %v1289 = vsel %vm1159, %v1275, 0.0
        %1290 = vadd.xlane.f32.xlu0 %v1289
        %v1291 = vpop.xlane.xlu0 %1290
        %v1292 = vsel %vm1159, %v1276, 0.0
        %1293 = vadd.xlane.f32.xlu0 %v1292
        %v1294 = vpop.xlane.xlu0 %1293
        %v1295 = vsel %vm1159, %v1277, 0.0
        %1296 = vadd.xlane.f32.xlu0 %v1295
        %v1297 = vpop.xlane.xlu0 %1296
        %v1298 = vsel %vm1159, %v1278, 0.0
        %1299 = vadd.xlane.f32.xlu0 %v1298
        %v1300 = vpop.xlane.xlu0 %1299
        %v1301 = vsel %vm1159, %v1279, 0.0
        %1302 = vadd.xlane.f32.xlu0 %v1301
        %v1303 = vpop.xlane.xlu0 %1302
        %vm1304 = vcmask 7168
        %v1305 = vsel %vm1304, %v1162, %v1226
        %v1306 = vsel %vm1304, %v1165, %v1229
        %v1307 = vsel %vm1304, %v1168, %v1232
        %v1308 = vsel %vm1304, %v1171, %v1235
        %v1309 = vsel %vm1304, %v1174, %v1238
        %v1310 = vsel %vm1304, %v1177, %v1241
        %v1311 = vsel %vm1304, %v1180, %v1244
        %v1312 = vsel %vm1304, %v1183, %v1247
        %vm1313 = vcmask 15360
        %v1314 = vsel %vm1313, %v1305, %v1282
        %v1315 = vsel %vm1313, %v1306, %v1285
        %v1316 = vsel %vm1313, %v1307, %v1288
        %v1317 = vsel %vm1313, %v1308, %v1291
        %v1318 = vsel %vm1313, %v1309, %v1294
        %v1319 = vsel %vm1313, %v1310, %v1297
        %v1320 = vsel %vm1313, %v1311, %v1300
        %v1321 = vsel %vm1313, %v1312, %v1303
        %vm1322 = vcmask 23552
        %v1323 = vsel %vm1322, %v1314, 0.0
        %v1324 = vrot.slane %v1323, 4
        %v1325 = vadd.f32 %v1323, %v1324
        %v1326 = vrot.slane %v1325, 2
        %v1327 = vadd.f32 %v1325, %v1326
        %v1328 = vrot.slane %v1327, 1
        %v1329 = vadd.f32 %v1327, %v1328
        %v1330 = vsel %vm1322, %v1315, 0.0
        %v1331 = vrot.slane %v1330, 4
        %v1332 = vadd.f32 %v1330, %v1331
        %v1333 = vrot.slane %v1332, 2
        %v1334 = vadd.f32 %v1332, %v1333
        %v1335 = vrot.slane %v1334, 1
        %v1336 = vadd.f32 %v1334, %v1335
        %v1337 = vsel %vm1322, %v1316, 0.0
        %v1338 = vrot.slane %v1337, 4
        %v1339 = vadd.f32 %v1337, %v1338
        %v1340 = vrot.slane %v1339, 2
        %v1341 = vadd.f32 %v1339, %v1340
        %v1342 = vrot.slane %v1341, 1
        %v1343 = vadd.f32 %v1341, %v1342
        %v1344 = vsel %vm1322, %v1317, 0.0
        %v1345 = vrot.slane %v1344, 4
        %v1346 = vadd.f32 %v1344, %v1345
        %v1347 = vrot.slane %v1346, 2
        %v1348 = vadd.f32 %v1346, %v1347
        %v1349 = vrot.slane %v1348, 1
        %v1350 = vadd.f32 %v1348, %v1349
        %v1351 = vsel %vm1322, %v1318, 0.0
        %v1352 = vrot.slane %v1351, 4
        %v1353 = vadd.f32 %v1351, %v1352
        %v1354 = vrot.slane %v1353, 2
        %v1355 = vadd.f32 %v1353, %v1354
        %v1356 = vrot.slane %v1355, 1
        %v1357 = vadd.f32 %v1355, %v1356
        %v1358 = vsel %vm1322, %v1319, 0.0
        %v1359 = vrot.slane %v1358, 4
        %v1360 = vadd.f32 %v1358, %v1359
        %v1361 = vrot.slane %v1360, 2
        %v1362 = vadd.f32 %v1360, %v1361
        %v1363 = vrot.slane %v1362, 1
        %v1364 = vadd.f32 %v1362, %v1363
        %v1365 = vsel %vm1322, %v1320, 0.0
        %v1366 = vrot.slane %v1365, 4
        %v1367 = vadd.f32 %v1365, %v1366
        %v1368 = vrot.slane %v1367, 2
        %v1369 = vadd.f32 %v1367, %v1368
        %v1370 = vrot.slane %v1369, 1
        %v1371 = vadd.f32 %v1369, %v1370
        %v1372 = vsel %vm1322, %v1321, 0.0
        %v1373 = vrot.slane %v1372, 4
        %v1374 = vadd.f32 %v1372, %v1373
        %v1375 = vrot.slane %v1374, 2
        %v1376 = vadd.f32 %v1374, %v1375
        %v1377 = vrot.slane %v1376, 1
        %v1378 = vadd.f32 %v1376, %v1377
        %vm1387 = vcmask 1041409
        %v1388 = vsel %vm1387, %v1336, %v1329
        %vm1389 = vcmask 1042434
        %v1390 = vsel %vm1389, %v1343, %v1388
        %vm1391 = vcmask 1043459
        %v1392 = vsel %vm1391, %v1350, %v1390
        %vm1393 = vcmask 1044484
        %v1394 = vsel %vm1393, %v1357, %v1392
        %vm1395 = vcmask 1045509
        %v1396 = vsel %vm1395, %v1364, %v1394
        %vm1397 = vcmask 1046534
        %v1398 = vsel %vm1397, %v1371, %v1396
        %vm1399 = vcmask 1047559
        %v1400 = vsel %vm1399, %v1378, %v1398
        %1402 = vst.msk [vmem:[%s239] sm:$0xff] %vm1322, %v1400
        %p1403 = scmp.lt.s32.totalorder %s17, 1
        %s1404 = scalar_select %p1403, %s17, 1
        %s1405 = smul.addr %s1404, 8
        %s1406 = scalar_lea.vmem %s4, %s1405
        // Predicated region
        $region45: #{tpu_custom_call.1} parent=35 // pred_check
          %p1407 = pneg %p129
        $region46: #{tpu_custom_call.1} parent=35 // pred_check_branch
          %1409 = sbr.rel (%p1407) target = $region48
        $region47: #{tpu_custom_call.1} parent=35 // pred_region
          _
        $region48: #{tpu_custom_call.1} parent=35 // pred_fallthru
          _
      $region36: #{tpu_custom_call.1} parent=5 // pred_fallthru
        _
      %p1410 = scmp.le.s32.totalorder 2, %s12
      // Predicated region
      $region49: #{tpu_custom_call.1} parent=5 // pred_check
        %p1411 = pneg %p1410
      $region50: #{tpu_custom_call.1} parent=5 // pred_check_branch
        %1413 = sbr.rel (%p1411) target = $region52
      $region51: #{tpu_custom_call.1} parent=5 // pred_region
        %s1414 = ssub.s32 %s12, 2
        // Predicated region
        $region53: #{tpu_custom_call.1} parent=51 // pred_check
          %p1415 = pneg %p135
        $region54: #{tpu_custom_call.1} parent=51 // pred_check_branch
          %1417 = sbr.rel (%p1415) target = $region56
        $region55: #{tpu_custom_call.1} parent=51 // pred_region
          %p1418 = scmp.lt.s32.totalorder %s18, 1
          %s1419 = scalar_select %p1418, %s18, 1
          %s1420 = smul.addr %s1419, 8
          %s1421 = scalar_lea.vmem %s4, %s1420
        $region56: #{tpu_custom_call.1} parent=51 // pred_fallthru
          _
      $region52: #{tpu_custom_call.1} parent=5 // pred_fallthru
        _
    $region6: #{tpu_custom_call.1} parent=1 // loop_footer
      %s16 = sadd.s32 1, %s12
    $region7: #{tpu_custom_call.1} parent=1 // loop_footer_branch
      %11 = sbr.rel target = $region3
    $region8: #{tpu_custom_call.1} parent=1 // loop_exit
      _
    %1422 = vsyncpa [#allocation3], 1
    %s1423 = scalar_lea.sflag [#allocation3], 1
    %1424 = vsyncpa %s1423, 1
    %1425 = vsyncpa [#allocation5], 1

</llo_original>
